<compile_context>
chip_gen: v7x
topology: tpu7x:2x2x1
jax: 0.10.0
libtpu: 0.0.40
codegen_flags: <defaults>
</compile_context>

<pallas_src>
import functools

import jax
import jax.numpy as jnp
from jax.experimental import pallas as pl
from jax.experimental.pallas import tpu as pltpu

KSIZE = 5
LEAKY_SLOPE = 0.1


# ----------------------------------------------------------------------------
# Fused kernel: one grid step == one image.
#   depthwise 5x5 -> BN1 -> LeakyReLU(0.1) -> 1x1 conv -> BN2 -> border bias
# Layout inside the kernel: rows on sublanes, W*C (resp. W*Cout) on lanes.
# ----------------------------------------------------------------------------
def _deepwish_fused_kernel(x_ref, wtap_ref, s1_ref, b1_ref, wpw_ref, s2_ref,
                           b2_ref, o_ref, *, h, w, c, cout):
    wc = w * c
    wcout = w * cout

    x = x_ref[0]            # (h+4, (w+4)*c) : input image, spatially pre-padded by 2
    wtap = wtap_ref[...]    # (25, w*c)      : per-tap dw weights tiled across W (hoisted load)

    # --- depthwise 5x5: 25 shifted multiply-adds on the VPU -------------------
    # A shift of `dw` columns in W is a contiguous shift of dw*c lanes in the
    # flattened axis, so every tap is a static 2-D slice of the same slab.
    acc = jnp.zeros((h, wc), jnp.float32)
    for dh in range(KSIZE):
        for dw in range(KSIZE):
            acc = acc + x[dh:dh + h, dw * c:dw * c + wc] * wtap[dh * KSIZE + dw, :]

    # --- BN1 (eval-mode, folded) + LeakyReLU(0.1) ------------------------------
    a = acc * s1_ref[0] + b1_ref[0]
    a = jnp.where(a >= 0, a, LEAKY_SLOPE * a)

    # --- 1x1 conv + BN2 as a single MXU matmul ---------------------------------
    # wpw_ref is the (Cin, Cout) 1x1 weight expanded block-diagonally to
    # (w*c, w*cout): the pointwise stage runs directly on the lane-flattened
    # activations and produces a lane-dense (h, w*cout) result.
    # (For toy channel counts we keep f32 operands to stay close to PyTorch
    #  numerics; at real channel counts cast operands to bf16 on v6e/v7x.)
    z = jnp.dot(a, wpw_ref[...], preferred_element_type=jnp.float32)
    z = z * s2_ref[0] + b2_ref[0]

    # --- border of the 1x1 conv's padding=1: those pixels only ever see the
    #     BN affine term (conv of the zero padding) -----------------------------
    row = jax.lax.broadcasted_iota(jnp.int32, (h, wcout), 0)
    col = jax.lax.broadcasted_iota(jnp.int32, (h, wcout), 1)
    border = (row == 0) | (row == h - 1) | (col < cout) | (col >= (w - 1) * cout)
    o_ref[0] = jnp.where(border, b2_ref[0], z)


def deepwish_fused(xq_flat, w_taps, s1_t, b1_t, w_pw_bd, s2_t, b2_t,
                   *, h, w, c, cout):
    n = xq_flat.shape[0]
    kernel = functools.partial(_deepwish_fused_kernel, h=h, w=w, c=c, cout=cout)
    return pl.pallas_call(
        kernel,
        out_shape=jax.ShapeDtypeStruct((n, h, w * cout), jnp.float32),
        grid_spec=pltpu.PrefetchScalarGridSpec(
            num_scalar_prefetch=0,
            # One image per step keeps the per-block VMEM tiny (a whole f32
            # feature map at these sizes is a few KB); the batch axis is
            # 'parallel' so the megacore can shard it.
            grid=(n,),
            in_specs=[
                pl.BlockSpec((1, h + 4, (w + 4) * c), lambda i: (i, 0, 0)),
                # weights / folded-BN vectors: same block every step -> resident
                pl.BlockSpec((KSIZE * KSIZE, w * c), lambda i: (0, 0)),
                pl.BlockSpec((1, w * c), lambda i: (0, 0)),
                pl.BlockSpec((1, w * c), lambda i: (0, 0)),
                pl.BlockSpec((w * c, w * cout), lambda i: (0, 0)),
                pl.BlockSpec((1, w * cout), lambda i: (0, 0)),
                pl.BlockSpec((1, w * cout), lambda i: (0, 0)),
            ],
            out_specs=pl.BlockSpec((1, h, w * cout), lambda i: (i, 0, 0)),
        ),
        compiler_params=pltpu.CompilerParams(
            dimension_semantics=("parallel",),
        ),
    )(xq_flat, w_taps, s1_t, b1_t, w_pw_bd, s2_t, b2_t)


# ----------------------------------------------------------------------------
# Parameter setup + module-level forward
# ----------------------------------------------------------------------------
def make_deepwish_params(key, in_channels, out_channels, eps=1e-4):
    ks = jax.random.split(key, 10)

    def _bn(kg, kb, km, kv, ch):
        gamma = 1.0 + 0.1 * jax.random.normal(kg, (ch,), jnp.float32)
        beta = 0.1 * jax.random.normal(kb, (ch,), jnp.float32)
        rmean = 0.1 * jax.random.normal(km, (ch,), jnp.float32)
        rvar = jnp.abs(1.0 + 0.1 * jax.random.normal(kv, (ch,), jnp.float32))
        scale = gamma / jnp.sqrt(rvar + eps)
        bias = beta - rmean * scale
        return scale, bias

    # depthwise conv weight: PyTorch (C, 1, 5, 5) -> stored as (C, 5, 5)
    w_dw = 0.1 * jax.random.normal(ks[0], (in_channels, KSIZE, KSIZE), jnp.float32)
    scale1, bias1 = _bn(ks[1], ks[2], ks[3], ks[4], in_channels)
    # pointwise conv weight: PyTorch (Cout, Cin, 1, 1) -> stored as (Cout, Cin)
    w_pw = 0.1 * jax.random.normal(ks[5], (out_channels, in_channels), jnp.float32)
    scale2, bias2 = _bn(ks[6], ks[7], ks[8], ks[9], out_channels)
    return dict(w_dw=w_dw, scale1=scale1, bias1=bias1,
                w_pw=w_pw, scale2=scale2, bias2=bias2)


@jax.jit
def deepwish_forward(x_nchw, params):
    n, c, h, w = x_nchw.shape
    cout = params["w_pw"].shape[0]

    # NCHW -> NHWC (required by the interface) + one spatial pad of 2
    # (depthwise pad=1 plus one extra ring whose outputs are overwritten by the
    # pointwise border bias). XLA fuses the pad with the transpose pass; the
    # flatten to (..., (W+4)*C) is a free row-major reshape.
    x = jnp.transpose(x_nchw, (0, 2, 3, 1)).astype(jnp.float32)
    xq = jnp.pad(x, ((0, 0), (2, 2), (2, 2), (0, 0)))
    xq_flat = xq.reshape(n, h + 4, (w + 4) * c)

    # depthwise taps: (C,5,5) -> (25, C) -> tiled across W -> (25, W*C)
    w_taps = jnp.tile(
        jnp.transpose(params["w_dw"], (1, 2, 0)).reshape(KSIZE * KSIZE, c), (1, w))

    s1_t = jnp.tile(params["scale1"], w).reshape(1, w * c)
    b1_t = jnp.tile(params["bias1"], w).reshape(1, w * c)

    # 1x1 weight (Cout, Cin) -> (Cin, Cout) -> block-diagonal (W*C, W*Cout):
    # keeps the whole pointwise stage in the lane-flattened layout.
    w_pw_bd = jnp.kron(jnp.eye(w, dtype=jnp.float32),
                       jnp.transpose(params["w_pw"], (1, 0)))

    s2_t = jnp.tile(params["scale2"], w).reshape(1, w * cout)
    b2_t = jnp.tile(params["bias2"], w).reshape(1, w * cout)

    z_flat = deepwish_fused(xq_flat, w_taps, s1_t, b1_t, w_pw_bd, s2_t, b2_t,
                            h=h, w=w, c=c, cout=cout)
    z = z_flat.reshape(n, h, w, cout)
    return jnp.transpose(z, (0, 3, 1, 2))                      # NHWC -> NCHW


# ----------------------------------------------------------------------------
# Pure-JAX reference (eval-mode BN folded the same way) for self-validation
# ----------------------------------------------------------------------------
def _reference_forward(x_nchw, params, slope=LEAKY_SLOPE):
    c = x_nchw.shape[1]
    w_dw = params["w_dw"][:, None, :, :]                        # (C,1,5,5)
    y = jax.lax.conv_general_dilated(
        x_nchw, w_dw, (1, 1), ((1, 1), (1, 1)),
        dimension_numbers=("NCHW", "OIHW", "NCHW"),
        feature_group_count=c)
    y = y * params["scale1"][None, :, None, None] + params["bias1"][None, :, None, None]
    y = jnp.where(y >= 0, y, slope * y)
    w_pw = params["w_pw"][:, :, None, None]                     # (Cout,Cin,1,1)
    z = jax.lax.conv_general_dilated(
        y, w_pw, (1, 1), ((1, 1), (1, 1)),
        dimension_numbers=("NCHW", "OIHW", "NCHW"))
    return z * params["scale2"][None, :, None, None] + params["bias2"][None, :, None, None]


if __name__ == "__main__":
    key = jax.random.PRNGKey(0)
    k_x, k_p = jax.random.split(key)

    in_channels, out_channels = 4, 8
    x = jax.random.normal(k_x, (2, in_channels, 16, 16), jnp.float32)  # NCHW
    params = make_deepwish_params(k_p, in_channels, out_channels)

    out = jax.block_until_ready(deepwish_forward(x, params))

    assert out.shape == (2, out_channels, 16, 16), out.shape
    assert out.dtype == jnp.float32
    assert bool(jnp.all(jnp.isfinite(out)))

    # correctness vs. pure-JAX reference (tolerance covers MXU default-precision
    # products in the 1x1 stage on both paths)
    ref = _reference_forward(x, params)
    max_err = float(jnp.max(jnp.abs(out - ref)))
    assert bool(jnp.allclose(out, ref, rtol=2e-2, atol=5e-3)), max_err

    print("KERNEL_OK")
</pallas_src>

<mosaic_0001>
module attributes {stable_mosaic.version = 11 : i64} {
  func.func @_deepwish_fused_kernel(%arg0: i32, %arg1: memref<1x20x80xf32, #tpu.memory_space<vmem>>, %arg2: memref<25x64xf32, #tpu.memory_space<vmem>>, %arg3: memref<1x64xf32, #tpu.memory_space<vmem>>, %arg4: memref<1x64xf32, #tpu.memory_space<vmem>>, %arg5: memref<64x128xf32, #tpu.memory_space<vmem>>, %arg6: memref<1x128xf32, #tpu.memory_space<vmem>>, %arg7: memref<1x128xf32, #tpu.memory_space<vmem>>, %arg8: memref<1x16x128xf32, #tpu.memory_space<vmem>>) attributes {dimension_semantics = [#tpu.dimension_semantics<parallel>], iteration_bounds = array<i64: 2>, scalar_prefetch = 0 : i64, scratch_operands = 0 : i64, tpu.core_type = #tpu.core_type<tc>, window_params = [{transform_indices = @transform_0, window_bounds = array<i64: 1, 20, 80>}, {pipeline_mode = #tpu.pipeline_mode<synchronous>, transform_indices = @transform_1, window_bounds = array<i64: 25, 64>}, {pipeline_mode = #tpu.pipeline_mode<synchronous>, transform_indices = @transform_2, window_bounds = array<i64: 1, 64>}, {pipeline_mode = #tpu.pipeline_mode<synchronous>, transform_indices = @transform_3, window_bounds = array<i64: 1, 64>}, {pipeline_mode = #tpu.pipeline_mode<synchronous>, transform_indices = @transform_4, window_bounds = array<i64: 64, 128>}, {pipeline_mode = #tpu.pipeline_mode<synchronous>, transform_indices = @transform_5, window_bounds = array<i64: 1, 128>}, {pipeline_mode = #tpu.pipeline_mode<synchronous>, transform_indices = @transform_6, window_bounds = array<i64: 1, 128>}, {transform_indices = @transform_7, window_bounds = array<i64: 1, 16, 128>}]} {
    %c0 = arith.constant 0 : index
    %c0_0 = arith.constant 0 : index
    %c0_1 = arith.constant 0 : index
    %0 = vector.load %arg1[%c0, %c0_0, %c0_1] : memref<1x20x80xf32, #tpu.memory_space<vmem>>, vector<1x20x80xf32>
    %1 = vector.shape_cast %0 : vector<1x20x80xf32> to vector<20x80xf32>
    %c0_2 = arith.constant 0 : index
    %c0_3 = arith.constant 0 : index
    %2 = vector.load %arg2[%c0_2, %c0_3] : memref<25x64xf32, #tpu.memory_space<vmem>>, vector<25x64xf32>
    %cst = arith.constant 0.000000e+00 : f32
    %3 = vector.broadcast %cst : f32 to vector<16x64xf32>
    %4 = vector.extract_strided_slice %1 {offsets = [0, 0], sizes = [16, 64], strides = [1, 1]} : vector<20x80xf32> to vector<16x64xf32>
    %5 = vector.extract_strided_slice %2 {offsets = [0, 0], sizes = [1, 64], strides = [1, 1]} : vector<25x64xf32> to vector<1x64xf32>
    %6 = vector.shape_cast %5 : vector<1x64xf32> to vector<64xf32>
    %7 = vector.shape_cast %6 : vector<64xf32> to vector<1x64xf32>
    %8 = vector.broadcast %7 : vector<1x64xf32> to vector<16x64xf32>
    %9 = arith.mulf %4, %8 : vector<16x64xf32>
    %10 = arith.addf %3, %9 : vector<16x64xf32>
    %11 = vector.extract_strided_slice %1 {offsets = [0, 4], sizes = [16, 64], strides = [1, 1]} : vector<20x80xf32> to vector<16x64xf32>
    %12 = vector.extract_strided_slice %2 {offsets = [1, 0], sizes = [1, 64], strides = [1, 1]} : vector<25x64xf32> to vector<1x64xf32>
    %13 = vector.shape_cast %12 : vector<1x64xf32> to vector<64xf32>
    %14 = vector.shape_cast %13 : vector<64xf32> to vector<1x64xf32>
    %15 = vector.broadcast %14 : vector<1x64xf32> to vector<16x64xf32>
    %16 = arith.mulf %11, %15 : vector<16x64xf32>
    %17 = arith.addf %10, %16 : vector<16x64xf32>
    %18 = vector.extract_strided_slice %1 {offsets = [0, 8], sizes = [16, 64], strides = [1, 1]} : vector<20x80xf32> to vector<16x64xf32>
    %19 = vector.extract_strided_slice %2 {offsets = [2, 0], sizes = [1, 64], strides = [1, 1]} : vector<25x64xf32> to vector<1x64xf32>
    %20 = vector.shape_cast %19 : vector<1x64xf32> to vector<64xf32>
    %21 = vector.shape_cast %20 : vector<64xf32> to vector<1x64xf32>
    %22 = vector.broadcast %21 : vector<1x64xf32> to vector<16x64xf32>
    %23 = arith.mulf %18, %22 : vector<16x64xf32>
    %24 = arith.addf %17, %23 : vector<16x64xf32>
    %25 = vector.extract_strided_slice %1 {offsets = [0, 12], sizes = [16, 64], strides = [1, 1]} : vector<20x80xf32> to vector<16x64xf32>
    %26 = vector.extract_strided_slice %2 {offsets = [3, 0], sizes = [1, 64], strides = [1, 1]} : vector<25x64xf32> to vector<1x64xf32>
    %27 = vector.shape_cast %26 : vector<1x64xf32> to vector<64xf32>
    %28 = vector.shape_cast %27 : vector<64xf32> to vector<1x64xf32>
    %29 = vector.broadcast %28 : vector<1x64xf32> to vector<16x64xf32>
    %30 = arith.mulf %25, %29 : vector<16x64xf32>
    %31 = arith.addf %24, %30 : vector<16x64xf32>
    %32 = vector.extract_strided_slice %1 {offsets = [0, 16], sizes = [16, 64], strides = [1, 1]} : vector<20x80xf32> to vector<16x64xf32>
    %33 = vector.extract_strided_slice %2 {offsets = [4, 0], sizes = [1, 64], strides = [1, 1]} : vector<25x64xf32> to vector<1x64xf32>
    %34 = vector.shape_cast %33 : vector<1x64xf32> to vector<64xf32>
    %35 = vector.shape_cast %34 : vector<64xf32> to vector<1x64xf32>
    %36 = vector.broadcast %35 : vector<1x64xf32> to vector<16x64xf32>
    %37 = arith.mulf %32, %36 : vector<16x64xf32>
    %38 = arith.addf %31, %37 : vector<16x64xf32>
    %39 = vector.extract_strided_slice %1 {offsets = [1, 0], sizes = [16, 64], strides = [1, 1]} : vector<20x80xf32> to vector<16x64xf32>
    %40 = vector.extract_strided_slice %2 {offsets = [5, 0], sizes = [1, 64], strides = [1, 1]} : vector<25x64xf32> to vector<1x64xf32>
    %41 = vector.shape_cast %40 : vector<1x64xf32> to vector<64xf32>
    %42 = vector.shape_cast %41 : vector<64xf32> to vector<1x64xf32>
    %43 = vector.broadcast %42 : vector<1x64xf32> to vector<16x64xf32>
    %44 = arith.mulf %39, %43 : vector<16x64xf32>
    %45 = arith.addf %38, %44 : vector<16x64xf32>
    %46 = vector.extract_strided_slice %1 {offsets = [1, 4], sizes = [16, 64], strides = [1, 1]} : vector<20x80xf32> to vector<16x64xf32>
    %47 = vector.extract_strided_slice %2 {offsets = [6, 0], sizes = [1, 64], strides = [1, 1]} : vector<25x64xf32> to vector<1x64xf32>
    %48 = vector.shape_cast %47 : vector<1x64xf32> to vector<64xf32>
    %49 = vector.shape_cast %48 : vector<64xf32> to vector<1x64xf32>
    %50 = vector.broadcast %49 : vector<1x64xf32> to vector<16x64xf32>
    %51 = arith.mulf %46, %50 : vector<16x64xf32>
    %52 = arith.addf %45, %51 : vector<16x64xf32>
    %53 = vector.extract_strided_slice %1 {offsets = [1, 8], sizes = [16, 64], strides = [1, 1]} : vector<20x80xf32> to vector<16x64xf32>
    %54 = vector.extract_strided_slice %2 {offsets = [7, 0], sizes = [1, 64], strides = [1, 1]} : vector<25x64xf32> to vector<1x64xf32>
    %55 = vector.shape_cast %54 : vector<1x64xf32> to vector<64xf32>
    %56 = vector.shape_cast %55 : vector<64xf32> to vector<1x64xf32>
    %57 = vector.broadcast %56 : vector<1x64xf32> to vector<16x64xf32>
    %58 = arith.mulf %53, %57 : vector<16x64xf32>
    %59 = arith.addf %52, %58 : vector<16x64xf32>
    %60 = vector.extract_strided_slice %1 {offsets = [1, 12], sizes = [16, 64], strides = [1, 1]} : vector<20x80xf32> to vector<16x64xf32>
    %61 = vector.extract_strided_slice %2 {offsets = [8, 0], sizes = [1, 64], strides = [1, 1]} : vector<25x64xf32> to vector<1x64xf32>
    %62 = vector.shape_cast %61 : vector<1x64xf32> to vector<64xf32>
    %63 = vector.shape_cast %62 : vector<64xf32> to vector<1x64xf32>
    %64 = vector.broadcast %63 : vector<1x64xf32> to vector<16x64xf32>
    %65 = arith.mulf %60, %64 : vector<16x64xf32>
    %66 = arith.addf %59, %65 : vector<16x64xf32>
    %67 = vector.extract_strided_slice %1 {offsets = [1, 16], sizes = [16, 64], strides = [1, 1]} : vector<20x80xf32> to vector<16x64xf32>
    %68 = vector.extract_strided_slice %2 {offsets = [9, 0], sizes = [1, 64], strides = [1, 1]} : vector<25x64xf32> to vector<1x64xf32>
    %69 = vector.shape_cast %68 : vector<1x64xf32> to vector<64xf32>
    %70 = vector.shape_cast %69 : vector<64xf32> to vector<1x64xf32>
    %71 = vector.broadcast %70 : vector<1x64xf32> to vector<16x64xf32>
    %72 = arith.mulf %67, %71 : vector<16x64xf32>
    %73 = arith.addf %66, %72 : vector<16x64xf32>
    %74 = vector.extract_strided_slice %1 {offsets = [2, 0], sizes = [16, 64], strides = [1, 1]} : vector<20x80xf32> to vector<16x64xf32>
    %75 = vector.extract_strided_slice %2 {offsets = [10, 0], sizes = [1, 64], strides = [1, 1]} : vector<25x64xf32> to vector<1x64xf32>
    %76 = vector.shape_cast %75 : vector<1x64xf32> to vector<64xf32>
    %77 = vector.shape_cast %76 : vector<64xf32> to vector<1x64xf32>
    %78 = vector.broadcast %77 : vector<1x64xf32> to vector<16x64xf32>
    %79 = arith.mulf %74, %78 : vector<16x64xf32>
    %80 = arith.addf %73, %79 : vector<16x64xf32>
    %81 = vector.extract_strided_slice %1 {offsets = [2, 4], sizes = [16, 64], strides = [1, 1]} : vector<20x80xf32> to vector<16x64xf32>
    %82 = vector.extract_strided_slice %2 {offsets = [11, 0], sizes = [1, 64], strides = [1, 1]} : vector<25x64xf32> to vector<1x64xf32>
    %83 = vector.shape_cast %82 : vector<1x64xf32> to vector<64xf32>
    %84 = vector.shape_cast %83 : vector<64xf32> to vector<1x64xf32>
    %85 = vector.broadcast %84 : vector<1x64xf32> to vector<16x64xf32>
    %86 = arith.mulf %81, %85 : vector<16x64xf32>
    %87 = arith.addf %80, %86 : vector<16x64xf32>
    %88 = vector.extract_strided_slice %1 {offsets = [2, 8], sizes = [16, 64], strides = [1, 1]} : vector<20x80xf32> to vector<16x64xf32>
    %89 = vector.extract_strided_slice %2 {offsets = [12, 0], sizes = [1, 64], strides = [1, 1]} : vector<25x64xf32> to vector<1x64xf32>
    %90 = vector.shape_cast %89 : vector<1x64xf32> to vector<64xf32>
    %91 = vector.shape_cast %90 : vector<64xf32> to vector<1x64xf32>
    %92 = vector.broadcast %91 : vector<1x64xf32> to vector<16x64xf32>
    %93 = arith.mulf %88, %92 : vector<16x64xf32>
    %94 = arith.addf %87, %93 : vector<16x64xf32>
    %95 = vector.extract_strided_slice %1 {offsets = [2, 12], sizes = [16, 64], strides = [1, 1]} : vector<20x80xf32> to vector<16x64xf32>
    %96 = vector.extract_strided_slice %2 {offsets = [13, 0], sizes = [1, 64], strides = [1, 1]} : vector<25x64xf32> to vector<1x64xf32>
    %97 = vector.shape_cast %96 : vector<1x64xf32> to vector<64xf32>
    %98 = vector.shape_cast %97 : vector<64xf32> to vector<1x64xf32>
    %99 = vector.broadcast %98 : vector<1x64xf32> to vector<16x64xf32>
    %100 = arith.mulf %95, %99 : vector<16x64xf32>
    %101 = arith.addf %94, %100 : vector<16x64xf32>
    %102 = vector.extract_strided_slice %1 {offsets = [2, 16], sizes = [16, 64], strides = [1, 1]} : vector<20x80xf32> to vector<16x64xf32>
    %103 = vector.extract_strided_slice %2 {offsets = [14, 0], sizes = [1, 64], strides = [1, 1]} : vector<25x64xf32> to vector<1x64xf32>
    %104 = vector.shape_cast %103 : vector<1x64xf32> to vector<64xf32>
    %105 = vector.shape_cast %104 : vector<64xf32> to vector<1x64xf32>
    %106 = vector.broadcast %105 : vector<1x64xf32> to vector<16x64xf32>
    %107 = arith.mulf %102, %106 : vector<16x64xf32>
    %108 = arith.addf %101, %107 : vector<16x64xf32>
    %109 = vector.extract_strided_slice %1 {offsets = [3, 0], sizes = [16, 64], strides = [1, 1]} : vector<20x80xf32> to vector<16x64xf32>
    %110 = vector.extract_strided_slice %2 {offsets = [15, 0], sizes = [1, 64], strides = [1, 1]} : vector<25x64xf32> to vector<1x64xf32>
    %111 = vector.shape_cast %110 : vector<1x64xf32> to vector<64xf32>
    %112 = vector.shape_cast %111 : vector<64xf32> to vector<1x64xf32>
    %113 = vector.broadcast %112 : vector<1x64xf32> to vector<16x64xf32>
    %114 = arith.mulf %109, %113 : vector<16x64xf32>
    %115 = arith.addf %108, %114 : vector<16x64xf32>
    %116 = vector.extract_strided_slice %1 {offsets = [3, 4], sizes = [16, 64], strides = [1, 1]} : vector<20x80xf32> to vector<16x64xf32>
    %117 = vector.extract_strided_slice %2 {offsets = [16, 0], sizes = [1, 64], strides = [1, 1]} : vector<25x64xf32> to vector<1x64xf32>
    %118 = vector.shape_cast %117 : vector<1x64xf32> to vector<64xf32>
    %119 = vector.shape_cast %118 : vector<64xf32> to vector<1x64xf32>
    %120 = vector.broadcast %119 : vector<1x64xf32> to vector<16x64xf32>
    %121 = arith.mulf %116, %120 : vector<16x64xf32>
    %122 = arith.addf %115, %121 : vector<16x64xf32>
    %123 = vector.extract_strided_slice %1 {offsets = [3, 8], sizes = [16, 64], strides = [1, 1]} : vector<20x80xf32> to vector<16x64xf32>
    %124 = vector.extract_strided_slice %2 {offsets = [17, 0], sizes = [1, 64], strides = [1, 1]} : vector<25x64xf32> to vector<1x64xf32>
    %125 = vector.shape_cast %124 : vector<1x64xf32> to vector<64xf32>
    %126 = vector.shape_cast %125 : vector<64xf32> to vector<1x64xf32>
    %127 = vector.broadcast %126 : vector<1x64xf32> to vector<16x64xf32>
    %128 = arith.mulf %123, %127 : vector<16x64xf32>
    %129 = arith.addf %122, %128 : vector<16x64xf32>
    %130 = vector.extract_strided_slice %1 {offsets = [3, 12], sizes = [16, 64], strides = [1, 1]} : vector<20x80xf32> to vector<16x64xf32>
    %131 = vector.extract_strided_slice %2 {offsets = [18, 0], sizes = [1, 64], strides = [1, 1]} : vector<25x64xf32> to vector<1x64xf32>
    %132 = vector.shape_cast %131 : vector<1x64xf32> to vector<64xf32>
    %133 = vector.shape_cast %132 : vector<64xf32> to vector<1x64xf32>
    %134 = vector.broadcast %133 : vector<1x64xf32> to vector<16x64xf32>
    %135 = arith.mulf %130, %134 : vector<16x64xf32>
    %136 = arith.addf %129, %135 : vector<16x64xf32>
    %137 = vector.extract_strided_slice %1 {offsets = [3, 16], sizes = [16, 64], strides = [1, 1]} : vector<20x80xf32> to vector<16x64xf32>
    %138 = vector.extract_strided_slice %2 {offsets = [19, 0], sizes = [1, 64], strides = [1, 1]} : vector<25x64xf32> to vector<1x64xf32>
    %139 = vector.shape_cast %138 : vector<1x64xf32> to vector<64xf32>
    %140 = vector.shape_cast %139 : vector<64xf32> to vector<1x64xf32>
    %141 = vector.broadcast %140 : vector<1x64xf32> to vector<16x64xf32>
    %142 = arith.mulf %137, %141 : vector<16x64xf32>
    %143 = arith.addf %136, %142 : vector<16x64xf32>
    %144 = vector.extract_strided_slice %1 {offsets = [4, 0], sizes = [16, 64], strides = [1, 1]} : vector<20x80xf32> to vector<16x64xf32>
    %145 = vector.extract_strided_slice %2 {offsets = [20, 0], sizes = [1, 64], strides = [1, 1]} : vector<25x64xf32> to vector<1x64xf32>
    %146 = vector.shape_cast %145 : vector<1x64xf32> to vector<64xf32>
    %147 = vector.shape_cast %146 : vector<64xf32> to vector<1x64xf32>
    %148 = vector.broadcast %147 : vector<1x64xf32> to vector<16x64xf32>
    %149 = arith.mulf %144, %148 : vector<16x64xf32>
    %150 = arith.addf %143, %149 : vector<16x64xf32>
    %151 = vector.extract_strided_slice %1 {offsets = [4, 4], sizes = [16, 64], strides = [1, 1]} : vector<20x80xf32> to vector<16x64xf32>
    %152 = vector.extract_strided_slice %2 {offsets = [21, 0], sizes = [1, 64], strides = [1, 1]} : vector<25x64xf32> to vector<1x64xf32>
    %153 = vector.shape_cast %152 : vector<1x64xf32> to vector<64xf32>
    %154 = vector.shape_cast %153 : vector<64xf32> to vector<1x64xf32>
    %155 = vector.broadcast %154 : vector<1x64xf32> to vector<16x64xf32>
    %156 = arith.mulf %151, %155 : vector<16x64xf32>
    %157 = arith.addf %150, %156 : vector<16x64xf32>
    %158 = vector.extract_strided_slice %1 {offsets = [4, 8], sizes = [16, 64], strides = [1, 1]} : vector<20x80xf32> to vector<16x64xf32>
    %159 = vector.extract_strided_slice %2 {offsets = [22, 0], sizes = [1, 64], strides = [1, 1]} : vector<25x64xf32> to vector<1x64xf32>
    %160 = vector.shape_cast %159 : vector<1x64xf32> to vector<64xf32>
    %161 = vector.shape_cast %160 : vector<64xf32> to vector<1x64xf32>
    %162 = vector.broadcast %161 : vector<1x64xf32> to vector<16x64xf32>
    %163 = arith.mulf %158, %162 : vector<16x64xf32>
    %164 = arith.addf %157, %163 : vector<16x64xf32>
    %165 = vector.extract_strided_slice %1 {offsets = [4, 12], sizes = [16, 64], strides = [1, 1]} : vector<20x80xf32> to vector<16x64xf32>
    %166 = vector.extract_strided_slice %2 {offsets = [23, 0], sizes = [1, 64], strides = [1, 1]} : vector<25x64xf32> to vector<1x64xf32>
    %167 = vector.shape_cast %166 : vector<1x64xf32> to vector<64xf32>
    %168 = vector.shape_cast %167 : vector<64xf32> to vector<1x64xf32>
    %169 = vector.broadcast %168 : vector<1x64xf32> to vector<16x64xf32>
    %170 = arith.mulf %165, %169 : vector<16x64xf32>
    %171 = arith.addf %164, %170 : vector<16x64xf32>
    %172 = vector.extract_strided_slice %1 {offsets = [4, 16], sizes = [16, 64], strides = [1, 1]} : vector<20x80xf32> to vector<16x64xf32>
    %173 = vector.extract_strided_slice %2 {offsets = [24, 0], sizes = [1, 64], strides = [1, 1]} : vector<25x64xf32> to vector<1x64xf32>
    %174 = vector.shape_cast %173 : vector<1x64xf32> to vector<64xf32>
    %175 = vector.shape_cast %174 : vector<64xf32> to vector<1x64xf32>
    %176 = vector.broadcast %175 : vector<1x64xf32> to vector<16x64xf32>
    %177 = arith.mulf %172, %176 : vector<16x64xf32>
    %178 = arith.addf %171, %177 : vector<16x64xf32>
    %c0_4 = arith.constant 0 : index
    %c0_5 = arith.constant 0 : index
    %179 = vector.load %arg3[%c0_4, %c0_5] : memref<1x64xf32, #tpu.memory_space<vmem>>, vector<1x64xf32>
    %180 = vector.shape_cast %179 : vector<1x64xf32> to vector<64xf32>
    %181 = vector.shape_cast %180 : vector<64xf32> to vector<1x64xf32>
    %182 = vector.broadcast %181 : vector<1x64xf32> to vector<16x64xf32>
    %183 = arith.mulf %178, %182 : vector<16x64xf32>
    %c0_6 = arith.constant 0 : index
    %c0_7 = arith.constant 0 : index
    %184 = vector.load %arg4[%c0_6, %c0_7] : memref<1x64xf32, #tpu.memory_space<vmem>>, vector<1x64xf32>
    %185 = vector.shape_cast %184 : vector<1x64xf32> to vector<64xf32>
    %186 = vector.shape_cast %185 : vector<64xf32> to vector<1x64xf32>
    %187 = vector.broadcast %186 : vector<1x64xf32> to vector<16x64xf32>
    %188 = arith.addf %183, %187 : vector<16x64xf32>
    %cst_8 = arith.constant 0.000000e+00 : f32
    %189 = vector.broadcast %cst_8 : f32 to vector<16x64xf32>
    %190 = arith.cmpf oge, %188, %189 : vector<16x64xf32>
    %cst_9 = arith.constant 1.000000e-01 : f32
    %191 = vector.broadcast %cst_9 : f32 to vector<16x64xf32>
    %192 = arith.mulf %191, %188 : vector<16x64xf32>
    %193 = arith.select %190, %188, %192 : vector<16x64xi1>, vector<16x64xf32>
    %c0_10 = arith.constant 0 : index
    %c0_11 = arith.constant 0 : index
    %194 = vector.load %arg5[%c0_10, %c0_11] : memref<64x128xf32, #tpu.memory_space<vmem>>, vector<64x128xf32>
    %cst_12 = arith.constant dense<0.000000e+00> : vector<16x128xf32>
    %195 = tpu.matmul %193, %194, %cst_12 {dimension_numbers = #tpu.dot_dimension_numbers<[1], [0], [0], [1], [0, 0, 1, 1], [], []>} : vector<16x64xf32>, vector<64x128xf32>, vector<16x128xf32> -> vector<16x128xf32>
    %c0_13 = arith.constant 0 : index
    %c0_14 = arith.constant 0 : index
    %196 = vector.load %arg6[%c0_13, %c0_14] : memref<1x128xf32, #tpu.memory_space<vmem>>, vector<1x128xf32>
    %197 = vector.shape_cast %196 : vector<1x128xf32> to vector<128xf32>
    %198 = vector.shape_cast %197 : vector<128xf32> to vector<1x128xf32>
    %199 = vector.broadcast %198 : vector<1x128xf32> to vector<16x128xf32>
    %200 = arith.mulf %195, %199 : vector<16x128xf32>
    %c0_15 = arith.constant 0 : index
    %c0_16 = arith.constant 0 : index
    %201 = vector.load %arg7[%c0_15, %c0_16] : memref<1x128xf32, #tpu.memory_space<vmem>>, vector<1x128xf32>
    %202 = vector.shape_cast %201 : vector<1x128xf32> to vector<128xf32>
    %203 = vector.shape_cast %202 : vector<128xf32> to vector<1x128xf32>
    %204 = vector.broadcast %203 : vector<1x128xf32> to vector<16x128xf32>
    %205 = arith.addf %200, %204 : vector<16x128xf32>
    %206 = tpu.iota {dimensions = array<i32: 0>} : vector<16x128xi32>
    %207 = tpu.iota {dimensions = array<i32: 1>} : vector<16x128xi32>
    %c0_i32 = arith.constant 0 : i32
    %208 = vector.broadcast %c0_i32 : i32 to vector<16x128xi32>
    %209 = arith.cmpi eq, %206, %208 : vector<16x128xi32>
    %c15_i32 = arith.constant 15 : i32
    %210 = vector.broadcast %c15_i32 : i32 to vector<16x128xi32>
    %211 = arith.cmpi eq, %206, %210 : vector<16x128xi32>
    %212 = arith.ori %209, %211 : vector<16x128xi1>
    %c8_i32 = arith.constant 8 : i32
    %213 = vector.broadcast %c8_i32 : i32 to vector<16x128xi32>
    %214 = arith.cmpi slt, %207, %213 : vector<16x128xi32>
    %215 = arith.ori %212, %214 : vector<16x128xi1>
    %c120_i32 = arith.constant 120 : i32
    %216 = vector.broadcast %c120_i32 : i32 to vector<16x128xi32>
    %217 = arith.cmpi sge, %207, %216 : vector<16x128xi32>
    %218 = arith.ori %215, %217 : vector<16x128xi1>
    %c0_17 = arith.constant 0 : index
    %c0_18 = arith.constant 0 : index
    %219 = vector.load %arg7[%c0_17, %c0_18] : memref<1x128xf32, #tpu.memory_space<vmem>>, vector<1x128xf32>
    %220 = vector.shape_cast %219 : vector<1x128xf32> to vector<128xf32>
    %221 = vector.shape_cast %220 : vector<128xf32> to vector<1x128xf32>
    %222 = vector.broadcast %221 : vector<1x128xf32> to vector<16x128xf32>
    %223 = arith.select %218, %222, %205 : vector<16x128xi1>, vector<16x128xf32>
    %c0_19 = arith.constant 0 : index
    %c0_20 = arith.constant 0 : index
    %c0_21 = arith.constant 0 : index
    %224 = vector.load %arg8[%c0_19, %c0_20, %c0_21] : memref<1x16x128xf32, #tpu.memory_space<vmem>>, vector<1x16x128xf32>
    %225 = vector.shape_cast %224 : vector<1x16x128xf32> to vector<16x128xf32>
    %226 = vector.shape_cast %223 : vector<16x128xf32> to vector<1x16x128xf32>
    tpu.vector_store %arg8[%c0_19, %c0_20, %c0_21], %226 {strides = array<i32>} : memref<1x16x128xf32, #tpu.memory_space<vmem>>, vector<1x16x128xf32>,
    return
  }
  func.func @transform_0(%arg0: i32) -> (i32, i32, i32) {
    %c0_i32 = arith.constant 0 : i32
    %c0_i32_0 = arith.constant 0 : i32
    %c0_i32_1 = arith.constant 0 : i32
    return %arg0, %c0_i32, %c0_i32_0 : i32, i32, i32
  }
  func.func @transform_1(%arg0: i32) -> (i32, i32) {
    %c0_i32 = arith.constant 0 : i32
    %c0_i32_0 = arith.constant 0 : i32
    %c0_i32_1 = arith.constant 0 : i32
    return %c0_i32, %c0_i32_0 : i32, i32
  }
  func.func @transform_2(%arg0: i32) -> (i32, i32) {
    %c0_i32 = arith.constant 0 : i32
    %c0_i32_0 = arith.constant 0 : i32
    %c0_i32_1 = arith.constant 0 : i32
    return %c0_i32, %c0_i32_0 : i32, i32
  }
  func.func @transform_3(%arg0: i32) -> (i32, i32) {
    %c0_i32 = arith.constant 0 : i32
    %c0_i32_0 = arith.constant 0 : i32
    %c0_i32_1 = arith.constant 0 : i32
    return %c0_i32, %c0_i32_0 : i32, i32
  }
  func.func @transform_4(%arg0: i32) -> (i32, i32) {
    %c0_i32 = arith.constant 0 : i32
    %c0_i32_0 = arith.constant 0 : i32
    %c0_i32_1 = arith.constant 0 : i32
    return %c0_i32, %c0_i32_0 : i32, i32
  }
  func.func @transform_5(%arg0: i32) -> (i32, i32) {
    %c0_i32 = arith.constant 0 : i32
    %c0_i32_0 = arith.constant 0 : i32
    %c0_i32_1 = arith.constant 0 : i32
    return %c0_i32, %c0_i32_0 : i32, i32
  }
  func.func @transform_6(%arg0: i32) -> (i32, i32) {
    %c0_i32 = arith.constant 0 : i32
    %c0_i32_0 = arith.constant 0 : i32
    %c0_i32_1 = arith.constant 0 : i32
    return %c0_i32, %c0_i32_0 : i32, i32
  }
  func.func @transform_7(%arg0: i32) -> (i32, i32, i32) {
    %c0_i32 = arith.constant 0 : i32
    %c0_i32_0 = arith.constant 0 : i32
    %c0_i32_1 = arith.constant 0 : i32
    return %arg0, %c0_i32, %c0_i32_0 : i32, i32, i32
  }
}

</mosaic_0001>

<llo_original>
// kernel: tile.31
$region0: #{tile.31}
  #allocation0 [shape = 's32[1]{0}', space=sflag, size = 0x4, scoped, tag = 'scoped memory for tile.31']
  %s0 = inlined_call_operand.vmem [shape: f32[4], index: 0, kind: input, shape index: {}]
  %s1 = inlined_call_operand.vmem [shape: f32[16,4], index: 1, kind: output, shape index: {}]
  // Predicated region
  $region2: #{tile.31} parent=0 // pred_check
    _
  $region3: #{tile.31} parent=0 // pred_check_branch
    %3 = sbr.rel (0) target = $region5
  $region4: #{tile.31} parent=0 // pred_region
    _
  $region5: #{tile.31} parent=0 // pred_fallthru
    _
  %v4 = vld [vmem:[%s0] ss:$0 sm:$0xff]
  %5 = vst [vmem:[%s1] sm:$0xff] %v4
  %s6 = scalar_lea.vmem %s1, 8
  %7 = vst [vmem:[%s6] sm:$0xff] %v4

// kernel: tile.32
$region0: #{tile.32}
  %s0 = inlined_call_operand.vmem [shape: f32[16,4], index: 0, kind: input, shape index: {}]
  %s1 = inlined_call_operand.vmem [shape: f32[1,64], index: 1, kind: output, shape index: {}]
  $region1: #{tile.32} parent=0
    #allocation0 [shape = 'u8[4096]{0}', space=vmem, size = 0x1000, scoped, tag = 'scoped mem for output reshape']
    %v2 = vld [vmem:[%s0] sm:$0x1]
    %vm3 = vcmask 31744
    %4 = vst.msk [vmem:[#allocation0] sm:$0x1] %vm3, %v2
    %s5 = scalar_lea.vmem %s0, 15
    %v6 = vld [vmem:[%s5] sm:$0x1]
    %7 = vrot.lane.b32.xlu0 %v6, 60
    %v8 = vpop.permute.xlu0 %7
    %vm9 = vcmask 523744
    %10 = vst.msk [vmem:[#allocation0] sm:$0x1] %vm9, %v8
    %s11 = scalar_lea.vmem %s0, 14
    %v12 = vld [vmem:[%s11] sm:$0x1]
    %13 = vrot.lane.b32.xlu0 %v12, 56
    %v14 = vpop.permute.xlu0 %13
    %vm15 = vcmask 490944
    %16 = vst.msk [vmem:[#allocation0] sm:$0x1] %vm15, %v14
    %s17 = scalar_lea.vmem %s0, 13
    %v18 = vld [vmem:[%s17] sm:$0x1]
    %19 = vrot.lane.b32.xlu0 %v18, 52
    %v20 = vpop.permute.xlu0 %19
    %vm21 = vcmask 458144
    %22 = vst.msk [vmem:[#allocation0] sm:$0x1] %vm21, %v20
    %s23 = scalar_lea.vmem %s0, 12
    %v24 = vld [vmem:[%s23] sm:$0x1]
    %25 = vrot.lane.b32.xlu0 %v24, 48
    %v26 = vpop.permute.xlu0 %25
    %vm27 = vcmask 425344
    %28 = vst.msk [vmem:[#allocation0] sm:$0x1] %vm27, %v26
    %s29 = scalar_lea.vmem %s0, 11
    %v30 = vld [vmem:[%s29] sm:$0x1]
    %31 = vrot.lane.b32.xlu0 %v30, 44
    %v32 = vpop.permute.xlu0 %31
    %vm33 = vcmask 392544
    %34 = vst.msk [vmem:[#allocation0] sm:$0x1] %vm33, %v32
    %s35 = scalar_lea.vmem %s0, 10
    %v36 = vld [vmem:[%s35] sm:$0x1]
    %37 = vrot.lane.b32.xlu0 %v36, 40
    %v38 = vpop.permute.xlu0 %37
    %vm39 = vcmask 359744
    %40 = vst.msk [vmem:[#allocation0] sm:$0x1] %vm39, %v38
    %s41 = scalar_lea.vmem %s0, 9
    %v42 = vld [vmem:[%s41] sm:$0x1]
    %43 = vrot.lane.b32.xlu0 %v42, 36
    %v44 = vpop.permute.xlu0 %43
    %vm45 = vcmask 326944
    %46 = vst.msk [vmem:[#allocation0] sm:$0x1] %vm45, %v44
    %s47 = scalar_lea.vmem %s0, 8
    %v48 = vld [vmem:[%s47] sm:$0x1]
    %49 = vrot.lane.b32.xlu0 %v48, 32
    %v50 = vpop.permute.xlu0 %49
    %vm51 = vcmask 294144
    %52 = vst.msk [vmem:[#allocation0] sm:$0x1] %vm51, %v50
    %s53 = scalar_lea.vmem %s0, 7
    %v54 = vld [vmem:[%s53] sm:$0x1]
    %55 = vrot.lane.b32.xlu0 %v54, 28
    %v56 = vpop.permute.xlu0 %55
    %vm57 = vcmask 261344
    %58 = vst.msk [vmem:[#allocation0] sm:$0x1] %vm57, %v56
    %s59 = scalar_lea.vmem %s0, 6
    %v60 = vld [vmem:[%s59] sm:$0x1]
    %61 = vrot.lane.b32.xlu0 %v60, 24
    %v62 = vpop.permute.xlu0 %61
    %vm63 = vcmask 228544
    %64 = vst.msk [vmem:[#allocation0] sm:$0x1] %vm63, %v62
    %s65 = scalar_lea.vmem %s0, 5
    %v66 = vld [vmem:[%s65] sm:$0x1]
    %67 = vrot.lane.b32.xlu0 %v66, 20
    %v68 = vpop.permute.xlu0 %67
    %vm69 = vcmask 195744
    %70 = vst.msk [vmem:[#allocation0] sm:$0x1] %vm69, %v68
    %s71 = scalar_lea.vmem %s0, 4
    %v72 = vld [vmem:[%s71] sm:$0x1]
    %73 = vrot.lane.b32.xlu0 %v72, 16
    %v74 = vpop.permute.xlu0 %73
    %vm75 = vcmask 162944
    %76 = vst.msk [vmem:[#allocation0] sm:$0x1] %vm75, %v74
    %s77 = scalar_lea.vmem %s0, 3
    %v78 = vld [vmem:[%s77] sm:$0x1]
    %79 = vrot.lane.b32.xlu0 %v78, 12
    %v80 = vpop.permute.xlu0 %79
    %vm81 = vcmask 130144
    %82 = vst.msk [vmem:[#allocation0] sm:$0x1] %vm81, %v80
    %s83 = scalar_lea.vmem %s0, 2
    %v84 = vld [vmem:[%s83] sm:$0x1]
    %85 = vrot.lane.b32.xlu0 %v84, 8
    %v86 = vpop.permute.xlu0 %85
    %vm87 = vcmask 97344
    %88 = vst.msk [vmem:[#allocation0] sm:$0x1] %vm87, %v86
    %s89 = scalar_lea.vmem %s0, 1
    %v90 = vld [vmem:[%s89] sm:$0x1]
    %91 = vrot.lane.b32.xlu0 %v90, 4
    %v92 = vpop.permute.xlu0 %91
    %vm93 = vcmask 64544
    %94 = vst.msk [vmem:[#allocation0] sm:$0x1] %vm93, %v92
    %s96 = sshllo.u32 0, 1
    %v98 = vld [vmem:[#allocation0] sm:%s96]
    %s99 = sshllo.u32 0, 1
    %100 = vst [vmem:[%s1] sm:%s99] %v98

// kernel: tile.41
$region0: #{tile.41}
  #allocation0 [shape = 's32[1]{0}', space=sflag, size = 0x4, scoped, tag = 'scoped memory for tile.41']
  %s0 = inlined_call_operand.vmem [shape: f32[8], index: 0, kind: input, shape index: {}]
  %s1 = inlined_call_operand.vmem [shape: f32[16,8], index: 1, kind: output, shape index: {}]
  // Predicated region
  $region2: #{tile.41} parent=0 // pred_check
    _
  $region3: #{tile.41} parent=0 // pred_check_branch
    %3 = sbr.rel (0) target = $region5
  $region4: #{tile.41} parent=0 // pred_region
    _
  $region5: #{tile.41} parent=0 // pred_fallthru
    _
  %v4 = vld [vmem:[%s0] ss:$0 sm:$0xff]
  %5 = vst [vmem:[%s1] sm:$0xff] %v4
  %s6 = scalar_lea.vmem %s1, 8
  %7 = vst [vmem:[%s6] sm:$0xff] %v4

// kernel: tile.42
$region0: #{tile.42}
  %s0 = inlined_call_operand.vmem [shape: f32[16,8], index: 0, kind: input, shape index: {}]
  %s1 = inlined_call_operand.vmem [shape: f32[1,128], index: 1, kind: output, shape index: {}]
  $region1: #{tile.42} parent=0
    #allocation0 [shape = 'u8[4096]{0}', space=vmem, size = 0x1000, scoped, tag = 'scoped mem for output reshape']
    %v2 = vld [vmem:[%s0] sm:$0x1]
    %vm3 = vcmask 64512
    %4 = vst.msk [vmem:[#allocation0] sm:$0x1] %vm3, %v2
    %s5 = scalar_lea.vmem %s0, 15
    %v6 = vld [vmem:[%s5] sm:$0x1]
    %7 = vrot.lane.b32.xlu0 %v6, 120
    %v8 = vpop.permute.xlu0 %7
    %vm9 = vcmask 1048512
    %10 = vst.msk [vmem:[#allocation0] sm:$0x1] %vm9, %v8
    %s11 = scalar_lea.vmem %s0, 14
    %v12 = vld [vmem:[%s11] sm:$0x1]
    %13 = vrot.lane.b32.xlu0 %v12, 112
    %v14 = vpop.permute.xlu0 %13
    %vm15 = vcmask 982912
    %16 = vst.msk [vmem:[#allocation0] sm:$0x1] %vm15, %v14
    %s17 = scalar_lea.vmem %s0, 13
    %v18 = vld [vmem:[%s17] sm:$0x1]
    %19 = vrot.lane.b32.xlu0 %v18, 104
    %v20 = vpop.permute.xlu0 %19
    %vm21 = vcmask 917312
    %22 = vst.msk [vmem:[#allocation0] sm:$0x1] %vm21, %v20
    %s23 = scalar_lea.vmem %s0, 12
    %v24 = vld [vmem:[%s23] sm:$0x1]
    %25 = vrot.lane.b32.xlu0 %v24, 96
    %v26 = vpop.permute.xlu0 %25
    %vm27 = vcmask 851712
    %28 = vst.msk [vmem:[#allocation0] sm:$0x1] %vm27, %v26
    %s29 = scalar_lea.vmem %s0, 11
    %v30 = vld [vmem:[%s29] sm:$0x1]
    %31 = vrot.lane.b32.xlu0 %v30, 88
    %v32 = vpop.permute.xlu0 %31
    %vm33 = vcmask 786112
    %34 = vst.msk [vmem:[#allocation0] sm:$0x1] %vm33, %v32
    %s35 = scalar_lea.vmem %s0, 10
    %v36 = vld [vmem:[%s35] sm:$0x1]
    %37 = vrot.lane.b32.xlu0 %v36, 80
    %v38 = vpop.permute.xlu0 %37
    %vm39 = vcmask 720512
    %40 = vst.msk [vmem:[#allocation0] sm:$0x1] %vm39, %v38
    %s41 = scalar_lea.vmem %s0, 9
    %v42 = vld [vmem:[%s41] sm:$0x1]
    %43 = vrot.lane.b32.xlu0 %v42, 72
    %v44 = vpop.permute.xlu0 %43
    %vm45 = vcmask 654912
    %46 = vst.msk [vmem:[#allocation0] sm:$0x1] %vm45, %v44
    %s47 = scalar_lea.vmem %s0, 8
    %v48 = vld [vmem:[%s47] sm:$0x1]
    %49 = vrot.lane.b32.xlu0 %v48, 64
    %v50 = vpop.permute.xlu0 %49
    %vm51 = vcmask 589312
    %52 = vst.msk [vmem:[#allocation0] sm:$0x1] %vm51, %v50
    %s53 = scalar_lea.vmem %s0, 7
    %v54 = vld [vmem:[%s53] sm:$0x1]
    %55 = vrot.lane.b32.xlu0 %v54, 56
    %v56 = vpop.permute.xlu0 %55
    %vm57 = vcmask 523712
    %58 = vst.msk [vmem:[#allocation0] sm:$0x1] %vm57, %v56
    %s59 = scalar_lea.vmem %s0, 6
    %v60 = vld [vmem:[%s59] sm:$0x1]
    %61 = vrot.lane.b32.xlu0 %v60, 48
    %v62 = vpop.permute.xlu0 %61
    %vm63 = vcmask 458112
    %64 = vst.msk [vmem:[#allocation0] sm:$0x1] %vm63, %v62
    %s65 = scalar_lea.vmem %s0, 5
    %v66 = vld [vmem:[%s65] sm:$0x1]
    %67 = vrot.lane.b32.xlu0 %v66, 40
    %v68 = vpop.permute.xlu0 %67
    %vm69 = vcmask 392512
    %70 = vst.msk [vmem:[#allocation0] sm:$0x1] %vm69, %v68
    %s71 = scalar_lea.vmem %s0, 4
    %v72 = vld [vmem:[%s71] sm:$0x1]
    %73 = vrot.lane.b32.xlu0 %v72, 32
    %v74 = vpop.permute.xlu0 %73
    %vm75 = vcmask 326912
    %76 = vst.msk [vmem:[#allocation0] sm:$0x1] %vm75, %v74
    %s77 = scalar_lea.vmem %s0, 3
    %v78 = vld [vmem:[%s77] sm:$0x1]
    %79 = vrot.lane.b32.xlu0 %v78, 24
    %v80 = vpop.permute.xlu0 %79
    %vm81 = vcmask 261312
    %82 = vst.msk [vmem:[#allocation0] sm:$0x1] %vm81, %v80
    %s83 = scalar_lea.vmem %s0, 2
    %v84 = vld [vmem:[%s83] sm:$0x1]
    %85 = vrot.lane.b32.xlu0 %v84, 16
    %v86 = vpop.permute.xlu0 %85
    %vm87 = vcmask 195712
    %88 = vst.msk [vmem:[#allocation0] sm:$0x1] %vm87, %v86
    %s89 = scalar_lea.vmem %s0, 1
    %v90 = vld [vmem:[%s89] sm:$0x1]
    %91 = vrot.lane.b32.xlu0 %v90, 8
    %v92 = vpop.permute.xlu0 %91
    %vm93 = vcmask 130112
    %94 = vst.msk [vmem:[#allocation0] sm:$0x1] %vm93, %v92
    %s96 = sshllo.u32 0, 1
    %v98 = vld [vmem:[#allocation0] sm:%s96]
    %s99 = sshllo.u32 0, 1
    %100 = vst [vmem:[%s1] sm:%s99] %v98

// kernel: deepwish_forward.1
$region0: #{deepwish_forward.1}
  #allocation0 [shape = 'u32[]', space=smem, size = 0x4, offset = 0x4, fixed_abs, tag = 'smem constant byte address 0x4 - core index']
  #allocation1 [shape = 'u32[144,128]{1,0:T(1,128)}', space=vmem, size = 0x12000, scoped, tag = 'internal scratch']
  %s0 = inlined_call_operand.vmem [shape: f32[2,20,80], index: 0, kind: input, shape index: {}]
  %s1 = inlined_call_operand.vmem [shape: f32[25,64], index: 1, kind: input, shape index: {}]
  %s2 = inlined_call_operand.vmem [shape: f32[1,64], index: 2, kind: input, shape index: {}]
  %s3 = inlined_call_operand.vmem [shape: f32[1,64], index: 3, kind: input, shape index: {}]
  %s4 = inlined_call_operand.vmem [shape: f32[64,128], index: 4, kind: input, shape index: {}]
  %s5 = inlined_call_operand.vmem [shape: f32[1,128], index: 5, kind: input, shape index: {}]
  %s6 = inlined_call_operand.vmem [shape: f32[1,128], index: 6, kind: input, shape index: {}]
  %s7 = inlined_call_operand.vmem [shape: f32[2,16,128], index: 7, kind: output, shape index: {}]
  %s8 = sld [smem:[#allocation0]]
  $region61: #{deepwish_forward.1} parent=0
    _
  %s10 = ssub.s32 1, %s8
  %s11 = scalar_select 0, %s10, %s8
  loop: start=0, step=1, limit=4
  $region2: #{deepwish_forward.1} parent=0 // loop_pre_header
    _
  $region3: #{deepwish_forward.1} parent=0 // loop_header
    %s13 = sphi 0, %s17
    %p14 = scmp.ge.s32.totalorder %s13, 4
    %s23 = sphi 0, %s25
    %s26 = sphi 0, %s23
    %s27 = sphi 0, %s26
    %s43 = sphi 0, %s27
    %s47 = sphi 0, %s47
    %s49 = sphi 0, %s47
    %s50 = sphi 0, %s49
    %s64 = sphi 0, %s50
    %s68 = sphi 0, %s68
    %s70 = sphi 0, %s68
    %s71 = sphi 0, %s70
    %s85 = sphi 0, %s71
    %s89 = sphi 0, %s89
    %s91 = sphi 0, %s89
    %s92 = sphi 0, %s91
    %s106 = sphi 0, %s92
    %s110 = sphi 0, %s110
    %s112 = sphi 0, %s110
    %s113 = sphi 0, %s112
    %s127 = sphi 0, %s113
    %s131 = sphi 0, %s131
    %s133 = sphi 0, %s131
    %s134 = sphi 0, %s133
    %s148 = sphi 0, %s134
    %s152 = sphi 0, %s152
    %s154 = sphi 0, %s152
    %s155 = sphi 0, %s154
    %s169 = sphi 0, %s155
    %s175 = sphi 0, %s177
    %s178 = sphi 0, %s175
    %s179 = sphi 0, %s178
    %s195 = sphi 0, %s179
  $region4: #{deepwish_forward.1} parent=0 // loop_header_branch
    %16 = sbr.rel (%p14) target = $region8
  $region5: #{deepwish_forward.1} parent=0 // loop_body
    %s18 = ssub.s32 %s13, 1
    %s19 = ssub.s32 %s13, 2
    %s20 = sadd.s32 %s13, 1
    %s21 = ssub.s32 %s13, %s20
    %p22 = scmp.eq.s32.totalorder %s21, 0
    %s24 = sadd.s32 %s23, 1
    %s25 = scalar_select %p22, %s23, %s24
    %p28 = pneg %p22
    %p29 = scmp.eq.s32.totalorder %s13, 1
    %p30 = por %p28, %p29
    %p31 = scmp.ne.s32.totalorder %s23, %s26
    %p32 = scmp.eq.s32.totalorder %s13, 0
    %p33 = por %p31, %p32
    %p34 = scmp.ne.s32.totalorder %s23, %s26
    %p35 = scmp.eq.s32.totalorder %s18, 1
    %p36 = por %p34, %p35
    %p37 = scmp.ne.s32.totalorder %s26, %s27
    %p38 = scmp.eq.s32.totalorder %s18, 0
    %p39 = por %p37, %p38
    %p40 = scmp.ne.s32.totalorder %s26, %s27
    %p41 = scmp.eq.s32.totalorder %s19, 1
    %p42 = por %p40, %p41
    %p44 = scmp.ne.s32.totalorder %s27, %s43
    %p45 = scmp.eq.s32.totalorder %s19, 0
    %p46 = por %p44, %p45
    %s48 = sadd.s32 %s47, 1
    %p51 = scmp.eq.s32.totalorder %s13, 1
    %p52 = scmp.ne.s32.totalorder %s47, %s49
    %p53 = scmp.eq.s32.totalorder %s13, 0
    %p54 = por %p52, %p53
    %p55 = scmp.ne.s32.totalorder %s47, %s49
    %p56 = scmp.eq.s32.totalorder %s18, 1
    %p57 = por %p55, %p56
    %p58 = scmp.ne.s32.totalorder %s49, %s50
    %p59 = scmp.eq.s32.totalorder %s18, 0
    %p60 = por %p58, %p59
    %p61 = scmp.ne.s32.totalorder %s49, %s50
    %p62 = scmp.eq.s32.totalorder %s19, 1
    %p63 = por %p61, %p62
    %p65 = scmp.ne.s32.totalorder %s50, %s64
    %p66 = scmp.eq.s32.totalorder %s19, 0
    %p67 = por %p65, %p66
    %s69 = sadd.s32 %s68, 1
    %p72 = scmp.eq.s32.totalorder %s13, 1
    %p73 = scmp.ne.s32.totalorder %s68, %s70
    %p74 = scmp.eq.s32.totalorder %s13, 0
    %p75 = por %p73, %p74
    %p76 = scmp.ne.s32.totalorder %s68, %s70
    %p77 = scmp.eq.s32.totalorder %s18, 1
    %p78 = por %p76, %p77
    %p79 = scmp.ne.s32.totalorder %s70, %s71
    %p80 = scmp.eq.s32.totalorder %s18, 0
    %p81 = por %p79, %p80
    %p82 = scmp.ne.s32.totalorder %s70, %s71
    %p83 = scmp.eq.s32.totalorder %s19, 1
    %p84 = por %p82, %p83
    %p86 = scmp.ne.s32.totalorder %s71, %s85
    %p87 = scmp.eq.s32.totalorder %s19, 0
    %p88 = por %p86, %p87
    %s90 = sadd.s32 %s89, 1
    %p93 = scmp.eq.s32.totalorder %s13, 1
    %p94 = scmp.ne.s32.totalorder %s89, %s91
    %p95 = scmp.eq.s32.totalorder %s13, 0
    %p96 = por %p94, %p95
    %p97 = scmp.ne.s32.totalorder %s89, %s91
    %p98 = scmp.eq.s32.totalorder %s18, 1
    %p99 = por %p97, %p98
    %p100 = scmp.ne.s32.totalorder %s91, %s92
    %p101 = scmp.eq.s32.totalorder %s18, 0
    %p102 = por %p100, %p101
    %p103 = scmp.ne.s32.totalorder %s91, %s92
    %p104 = scmp.eq.s32.totalorder %s19, 1
    %p105 = por %p103, %p104
    %p107 = scmp.ne.s32.totalorder %s92, %s106
    %p108 = scmp.eq.s32.totalorder %s19, 0
    %p109 = por %p107, %p108
    %s111 = sadd.s32 %s110, 1
    %p114 = scmp.eq.s32.totalorder %s13, 1
    %p115 = scmp.ne.s32.totalorder %s110, %s112
    %p116 = scmp.eq.s32.totalorder %s13, 0
    %p117 = por %p115, %p116
    %p118 = scmp.ne.s32.totalorder %s110, %s112
    %p119 = scmp.eq.s32.totalorder %s18, 1
    %p120 = por %p118, %p119
    %p121 = scmp.ne.s32.totalorder %s112, %s113
    %p122 = scmp.eq.s32.totalorder %s18, 0
    %p123 = por %p121, %p122
    %p124 = scmp.ne.s32.totalorder %s112, %s113
    %p125 = scmp.eq.s32.totalorder %s19, 1
    %p126 = por %p124, %p125
    %p128 = scmp.ne.s32.totalorder %s113, %s127
    %p129 = scmp.eq.s32.totalorder %s19, 0
    %p130 = por %p128, %p129
    %s132 = sadd.s32 %s131, 1
    %p135 = scmp.eq.s32.totalorder %s13, 1
    %p136 = scmp.ne.s32.totalorder %s131, %s133
    %p137 = scmp.eq.s32.totalorder %s13, 0
    %p138 = por %p136, %p137
    %p139 = scmp.ne.s32.totalorder %s131, %s133
    %p140 = scmp.eq.s32.totalorder %s18, 1
    %p141 = por %p139, %p140
    %p142 = scmp.ne.s32.totalorder %s133, %s134
    %p143 = scmp.eq.s32.totalorder %s18, 0
    %p144 = por %p142, %p143
    %p145 = scmp.ne.s32.totalorder %s133, %s134
    %p146 = scmp.eq.s32.totalorder %s19, 1
    %p147 = por %p145, %p146
    %p149 = scmp.ne.s32.totalorder %s134, %s148
    %p150 = scmp.eq.s32.totalorder %s19, 0
    %p151 = por %p149, %p150
    %s153 = sadd.s32 %s152, 1
    %p156 = scmp.eq.s32.totalorder %s13, 1
    %p157 = scmp.ne.s32.totalorder %s152, %s154
    %p158 = scmp.eq.s32.totalorder %s13, 0
    %p159 = por %p157, %p158
    %p160 = scmp.ne.s32.totalorder %s152, %s154
    %p161 = scmp.eq.s32.totalorder %s18, 1
    %p162 = por %p160, %p161
    %p163 = scmp.ne.s32.totalorder %s154, %s155
    %p164 = scmp.eq.s32.totalorder %s18, 0
    %p165 = por %p163, %p164
    %p166 = scmp.ne.s32.totalorder %s154, %s155
    %p167 = scmp.eq.s32.totalorder %s19, 1
    %p168 = por %p166, %p167
    %p170 = scmp.ne.s32.totalorder %s155, %s169
    %p171 = scmp.eq.s32.totalorder %s19, 0
    %p172 = por %p170, %p171
    %s173 = ssub.s32 %s13, %s20
    %p174 = scmp.eq.s32.totalorder %s173, 0
    %s176 = sadd.s32 %s175, 1
    %s177 = scalar_select %p174, %s175, %s176
    %p180 = pneg %p174
    %p181 = scmp.eq.s32.totalorder %s13, 1
    %p182 = por %p180, %p181
    %p183 = scmp.ne.s32.totalorder %s175, %s178
    %p184 = scmp.eq.s32.totalorder %s13, 0
    %p185 = por %p183, %p184
    %p186 = scmp.ne.s32.totalorder %s175, %s178
    %p187 = scmp.eq.s32.totalorder %s18, 1
    %p188 = por %p186, %p187
    %p189 = scmp.ne.s32.totalorder %s178, %s179
    %p190 = scmp.eq.s32.totalorder %s18, 0
    %p191 = por %p189, %p190
    %p192 = scmp.ne.s32.totalorder %s178, %s179
    %p193 = scmp.eq.s32.totalorder %s19, 1
    %p194 = por %p192, %p193
    %p196 = scmp.ne.s32.totalorder %s179, %s195
    %p197 = scmp.eq.s32.totalorder %s19, 0
    %p198 = por %p196, %p197
    %p199 = scmp.le.s32.totalorder 1, %s13
    %p200 = scmp.lt.s32.totalorder %s13, 3
    %p201 = pnand %p199, %p200
    %p202 = pneg %p201
    // Predicated region
    $region9: #{deepwish_forward.1} parent=5 // pred_check
      _
    $region10: #{deepwish_forward.1} parent=5 // pred_check_branch
      %204 = sbr.rel (%p201) target = $region12
    $region11: #{deepwish_forward.1} parent=5 // pred_region
      %s205 = ssub.s32 %s13, 1
      // Predicated region
      $region13: #{deepwish_forward.1} parent=11 // pred_check
        %p206 = pneg %p60
      $region14: #{deepwish_forward.1} parent=11 // pred_check_branch
        %208 = sbr.rel (%p206) target = $region16
      $region15: #{deepwish_forward.1} parent=11 // pred_region
        _
      $region16: #{deepwish_forward.1} parent=11 // pred_fallthru
        _
      // Predicated region
      $region17: #{deepwish_forward.1} parent=11 // pred_check
        %p209 = pneg %p81
      $region18: #{deepwish_forward.1} parent=11 // pred_check_branch
        %211 = sbr.rel (%p209) target = $region20
      $region19: #{deepwish_forward.1} parent=11 // pred_region
        _
      $region20: #{deepwish_forward.1} parent=11 // pred_fallthru
        _
      // Predicated region
      $region21: #{deepwish_forward.1} parent=11 // pred_check
        %p212 = pneg %p102
      $region22: #{deepwish_forward.1} parent=11 // pred_check_branch
        %214 = sbr.rel (%p212) target = $region24
      $region23: #{deepwish_forward.1} parent=11 // pred_region
        _
      $region24: #{deepwish_forward.1} parent=11 // pred_fallthru
        _
      // Predicated region
      $region25: #{deepwish_forward.1} parent=11 // pred_check
        %p215 = pneg %p123
      $region26: #{deepwish_forward.1} parent=11 // pred_check_branch
        %217 = sbr.rel (%p215) target = $region28
      $region27: #{deepwish_forward.1} parent=11 // pred_region
        _
      $region28: #{deepwish_forward.1} parent=11 // pred_fallthru
        _
      // Predicated region
      $region29: #{deepwish_forward.1} parent=11 // pred_check
        %p218 = pneg %p144
      $region30: #{deepwish_forward.1} parent=11 // pred_check_branch
        %220 = sbr.rel (%p218) target = $region32
      $region31: #{deepwish_forward.1} parent=11 // pred_region
        _
      $region32: #{deepwish_forward.1} parent=11 // pred_fallthru
        _
      // Predicated region
      $region33: #{deepwish_forward.1} parent=11 // pred_check
        %p221 = pneg %p165
      $region34: #{deepwish_forward.1} parent=11 // pred_check_branch
        %223 = sbr.rel (%p221) target = $region36
      $region35: #{deepwish_forward.1} parent=11 // pred_region
        _
      $region36: #{deepwish_forward.1} parent=11 // pred_fallthru
        _
    $region12: #{deepwish_forward.1} parent=5 // pred_fallthru
      _
    %p224 = scmp.lt.s32.totalorder %s13, 2
    // Predicated region
    $region37: #{deepwish_forward.1} parent=5 // pred_check
      %p225 = pneg %p224
    $region38: #{deepwish_forward.1} parent=5 // pred_check_branch
      %227 = sbr.rel (%p225) target = $region40
    $region39: #{deepwish_forward.1} parent=5 // pred_region
      // Predicated region
      $region41: #{deepwish_forward.1} parent=39 // pred_check
        %p228 = pneg %p33
      $region42: #{deepwish_forward.1} parent=39 // pred_check_branch
        %230 = sbr.rel (%p228) target = $region44
      $region43: #{deepwish_forward.1} parent=39 // pred_region
        %p231 = scmp.lt.s32.totalorder %s13, 1
        %s232 = scalar_select %p231, %s13, 1
        %s233 = smul.addr %s232, 3
        %s234 = smul.addr %s233, 8
        %s235 = scalar_lea.vmem %s0, %s234
      $region44: #{deepwish_forward.1} parent=39 // pred_fallthru
        _
    $region40: #{deepwish_forward.1} parent=5 // pred_fallthru
      _
    %p236 = scmp.le.s32.totalorder 1, %s13
    %p237 = scmp.lt.s32.totalorder %s13, 3
    %p238 = pnand %p236, %p237
    %p239 = pneg %p238
    // Predicated region
    $region45: #{deepwish_forward.1} parent=5 // pred_check
      _
    $region46: #{deepwish_forward.1} parent=5 // pred_check_branch
      %241 = sbr.rel (%p238) target = $region48
    $region47: #{deepwish_forward.1} parent=5 // pred_region
      %s242 = ssub.s32 %s13, 1
      %p243 = scmp.lt.s32.totalorder %s18, 1
      %s244 = scalar_select %p243, %s18, 1
      %s245 = smul.addr %s244, 3
      %s246 = smul.addr %s245, 8
      %s247 = scalar_lea.vmem %s0, %s246
      %p248 = pneg %p39
      %p249 = pneg %p36
      %p250 = pneg %p60
      %p251 = pneg %p57
      %p252 = pneg %p81
      %p253 = pneg %p78
      %p254 = pneg %p102
      %p255 = pneg %p99
      %p256 = pneg %p123
      %p257 = pneg %p120
      %p258 = pneg %p144
      %p259 = pneg %p141
      %p260 = pneg %p165
      %p261 = pneg %p162
      %p262 = pneg %p191
      %p263 = pneg %p188
      %p264 = scmp.lt.s32.totalorder %s18, 1
      %s265 = scalar_select %p264, %s18, 1
      %s266 = smul.addr %s265, 2
      %s267 = smul.addr %s266, 8
      %s268 = scalar_lea.vmem %s7, %s267
      %p269 = scmp.lt.s32.totalorder %s18, 1
      %s270 = scalar_select %p269, %s18, 1
      %s271 = smul.addr %s270, 3
      %s272 = smul.addr %s271, 8
      %s273 = scalar_lea.vmem %s0, %s272
      %p274 = scmp.lt.s32.totalorder %s18, 1
      %s275 = scalar_select %p274, %s18, 1
      %s276 = smul.addr %s275, 2
      %s277 = smul.addr %s276, 8
      %s278 = scalar_lea.vmem %s7, %s277
      %v279 = vld [vmem:[%s273] sm:$0xff]
      %v280 = vld [vmem:[%s273 + $0x8] sm:$0xff]
      %v281 = vld [vmem:[%s273 + $0x10] sm:$0xf]
      %v282 = vld [vmem:[%s1] sm:$0xff]
      %v283 = vld [vmem:[%s1 + $0x8] sm:$0xff]
      %v284 = vld [vmem:[%s1 + $0x10] sm:$0xff]
      %v285 = vld [vmem:[%s1 + $0x18] sm:$0x1]
      %v286 = vlaneseq
      %v287 = vshrl.u32 %v286, 7
      %v288 = vsub.s32 0, %v287
      %v289 = vrot.slane %v282, %v288
      %v290 = vmul.f32 %v279, %v289
      %v291 = vmul.f32 %v280, %v289
      %v292 = vadd.f32 %v290, 0.0
      %v293 = vadd.f32 %v291, 0.0
      %v294 = vlaneseq
      %v295 = vshrl.u32 %v294, 7
      %v296 = vsub.s32 1, %v295
      %v297 = vrot.slane %v282, %v296
      %299 = vrot.lane.b32.xlu0 %v297, 4
      %v300 = vpop.permute.xlu0 %299
      %v302 = vmul.f32 %v279, %v300
      %v303 = vmul.f32 %v280, %v300
      %306 = vrot.lane.b32.xlu0 %v302, 124
      %v307 = vpop.permute.xlu0 %306
      %308 = vrot.lane.b32.xlu0 %v303, 124
      %v309 = vpop.permute.xlu0 %308
      %v312 = vadd.f32 %v292, %v307
      %v313 = vadd.f32 %v293, %v309
      %v314 = vlaneseq
      %v315 = vshrl.u32 %v314, 7
      %v316 = vsub.s32 2, %v315
      %v317 = vrot.slane %v282, %v316
      %319 = vrot.lane.b32.xlu0 %v317, 8
      %v320 = vpop.permute.xlu0 %319
      %v322 = vmul.f32 %v279, %v320
      %v323 = vmul.f32 %v280, %v320
      %326 = vrot.lane.b32.xlu0 %v322, 120
      %v327 = vpop.permute.xlu0 %326
      %328 = vrot.lane.b32.xlu0 %v323, 120
      %v329 = vpop.permute.xlu0 %328
      %v332 = vadd.f32 %v312, %v327
      %v333 = vadd.f32 %v313, %v329
      %v334 = vlaneseq
      %v335 = vshrl.u32 %v334, 7
      %v336 = vsub.s32 3, %v335
      %v337 = vrot.slane %v282, %v336
      %339 = vrot.lane.b32.xlu0 %v337, 12
      %v340 = vpop.permute.xlu0 %339
      %v342 = vmul.f32 %v279, %v340
      %v343 = vmul.f32 %v280, %v340
      %346 = vrot.lane.b32.xlu0 %v342, 116
      %v347 = vpop.permute.xlu0 %346
      %348 = vrot.lane.b32.xlu0 %v343, 116
      %v349 = vpop.permute.xlu0 %348
      %v352 = vadd.f32 %v332, %v347
      %v353 = vadd.f32 %v333, %v349
      %v354 = vlaneseq
      %v355 = vshrl.u32 %v354, 7
      %v356 = vsub.s32 4, %v355
      %v357 = vrot.slane %v282, %v356
      %359 = vrot.lane.b32.xlu0 %v357, 16
      %v360 = vpop.permute.xlu0 %359
      %v362 = vmul.f32 %v279, %v360
      %v363 = vmul.f32 %v280, %v360
      %366 = vrot.lane.b32.xlu0 %v362, 112
      %v367 = vpop.permute.xlu0 %366
      %368 = vrot.lane.b32.xlu0 %v363, 112
      %v369 = vpop.permute.xlu0 %368
      %v372 = vadd.f32 %v352, %v367
      %v373 = vadd.f32 %v353, %v369
      %v374 = vlaneseq
      %v375 = vshrl.u32 %v374, 7
      %v376 = vsub.s32 5, %v375
      %v377 = vrot.slane %v282, %v376
      %v378 = vmul.f32 %v279, %v377
      %v379 = vmul.f32 %v280, %v377
      %v380 = vmul.f32 %v281, %v377
      %vm384 = vcmask 1046528
      %v385 = vrot.slane %v378, 1
      %v386 = vrot.slane %v379, 1
      %v387 = vsel %vm384, %v385, %v386
      %v388 = vrot.slane %v380, 1
      %v389 = vsel %vm384, %v386, %v388
      %v392 = vadd.f32 %v372, %v387
      %v393 = vadd.f32 %v373, %v389
      %v394 = vlaneseq
      %v395 = vshrl.u32 %v394, 7
      %v396 = vsub.s32 6, %v395
      %v397 = vrot.slane %v282, %v396
      %399 = vrot.lane.b32.xlu0 %v397, 4
      %v400 = vpop.permute.xlu0 %399
      %v402 = vmul.f32 %v279, %v400
      %v403 = vmul.f32 %v280, %v400
      %v404 = vmul.f32 %v281, %v400
      %v408 = vrot.slane %v402, 1
      %v409 = vrot.slane %v403, 1
      %v410 = vsel %vm384, %v408, %v409
      %v411 = vrot.slane %v404, 1
      %v412 = vsel %vm384, %v409, %v411
      %413 = vrot.lane.b32.xlu0 %v410, 124
      %v414 = vpop.permute.xlu0 %413
      %415 = vrot.lane.b32.xlu0 %v412, 124
      %v416 = vpop.permute.xlu0 %415
      %v419 = vadd.f32 %v392, %v414
      %v420 = vadd.f32 %v393, %v416
      %v421 = vlaneseq
      %v422 = vshrl.u32 %v421, 7
      %v423 = vsub.s32 7, %v422
      %v424 = vrot.slane %v282, %v423
      %426 = vrot.lane.b32.xlu0 %v424, 8
      %v427 = vpop.permute.xlu0 %426
      %v429 = vmul.f32 %v279, %v427
      %v430 = vmul.f32 %v280, %v427
      %v431 = vmul.f32 %v281, %v427
      %v435 = vrot.slane %v429, 1
      %v436 = vrot.slane %v430, 1
      %v437 = vsel %vm384, %v435, %v436
      %v438 = vrot.slane %v431, 1
      %v439 = vsel %vm384, %v436, %v438
      %440 = vrot.lane.b32.xlu0 %v437, 120
      %v441 = vpop.permute.xlu0 %440
      %442 = vrot.lane.b32.xlu0 %v439, 120
      %v443 = vpop.permute.xlu0 %442
      %v446 = vadd.f32 %v419, %v441
      %v447 = vadd.f32 %v420, %v443
      %v448 = vlaneseq
      %v449 = vshrl.u32 %v448, 7
      %v450 = vsub.s32 0, %v449
      %v451 = vrot.slane %v283, %v450
      %453 = vrot.lane.b32.xlu0 %v451, 12
      %v454 = vpop.permute.xlu0 %453
      %v456 = vmul.f32 %v279, %v454
      %v457 = vmul.f32 %v280, %v454
      %v458 = vmul.f32 %v281, %v454
      %v462 = vrot.slane %v456, 1
      %v463 = vrot.slane %v457, 1
      %v464 = vsel %vm384, %v462, %v463
      %v465 = vrot.slane %v458, 1
      %v466 = vsel %vm384, %v463, %v465
      %467 = vrot.lane.b32.xlu0 %v464, 116
      %v468 = vpop.permute.xlu0 %467
      %469 = vrot.lane.b32.xlu0 %v466, 116
      %v470 = vpop.permute.xlu0 %469
      %v473 = vadd.f32 %v446, %v468
      %v474 = vadd.f32 %v447, %v470
      %v475 = vlaneseq
      %v476 = vshrl.u32 %v475, 7
      %v477 = vsub.s32 1, %v476
      %v478 = vrot.slane %v283, %v477
      %480 = vrot.lane.b32.xlu0 %v478, 16
      %v481 = vpop.permute.xlu0 %480
      %v483 = vmul.f32 %v279, %v481
      %v484 = vmul.f32 %v280, %v481
      %v485 = vmul.f32 %v281, %v481
      %v489 = vrot.slane %v483, 1
      %v490 = vrot.slane %v484, 1
      %v491 = vsel %vm384, %v489, %v490
      %v492 = vrot.slane %v485, 1
      %v493 = vsel %vm384, %v490, %v492
      %494 = vrot.lane.b32.xlu0 %v491, 112
      %v495 = vpop.permute.xlu0 %494
      %496 = vrot.lane.b32.xlu0 %v493, 112
      %v497 = vpop.permute.xlu0 %496
      %v500 = vadd.f32 %v473, %v495
      %v501 = vadd.f32 %v474, %v497
      %v502 = vlaneseq
      %v503 = vshrl.u32 %v502, 7
      %v504 = vsub.s32 2, %v503
      %v505 = vrot.slane %v283, %v504
      %v506 = vmul.f32 %v279, %v505
      %v507 = vmul.f32 %v280, %v505
      %v508 = vmul.f32 %v281, %v505
      %vm512 = vcmask 1045504
      %v513 = vrot.slane %v506, 2
      %v514 = vrot.slane %v507, 2
      %v515 = vsel %vm512, %v513, %v514
      %v516 = vrot.slane %v508, 2
      %v517 = vsel %vm512, %v514, %v516
      %v520 = vadd.f32 %v500, %v515
      %v521 = vadd.f32 %v501, %v517
      %v522 = vlaneseq
      %v523 = vshrl.u32 %v522, 7
      %v524 = vsub.s32 3, %v523
      %v525 = vrot.slane %v283, %v524
      %527 = vrot.lane.b32.xlu0 %v525, 4
      %v528 = vpop.permute.xlu0 %527
      %v530 = vmul.f32 %v279, %v528
      %v531 = vmul.f32 %v280, %v528
      %v532 = vmul.f32 %v281, %v528
      %v536 = vrot.slane %v530, 2
      %v537 = vrot.slane %v531, 2
      %v538 = vsel %vm512, %v536, %v537
      %v539 = vrot.slane %v532, 2
      %v540 = vsel %vm512, %v537, %v539
      %541 = vrot.lane.b32.xlu0 %v538, 124
      %v542 = vpop.permute.xlu0 %541
      %543 = vrot.lane.b32.xlu0 %v540, 124
      %v544 = vpop.permute.xlu0 %543
      %v547 = vadd.f32 %v520, %v542
      %v548 = vadd.f32 %v521, %v544
      %v549 = vlaneseq
      %v550 = vshrl.u32 %v549, 7
      %v551 = vsub.s32 4, %v550
      %v552 = vrot.slane %v283, %v551
      %554 = vrot.lane.b32.xlu0 %v552, 8
      %v555 = vpop.permute.xlu0 %554
      %v557 = vmul.f32 %v279, %v555
      %v558 = vmul.f32 %v280, %v555
      %v559 = vmul.f32 %v281, %v555
      %v563 = vrot.slane %v557, 2
      %v564 = vrot.slane %v558, 2
      %v565 = vsel %vm512, %v563, %v564
      %v566 = vrot.slane %v559, 2
      %v567 = vsel %vm512, %v564, %v566
      %568 = vrot.lane.b32.xlu0 %v565, 120
      %v569 = vpop.permute.xlu0 %568
      %570 = vrot.lane.b32.xlu0 %v567, 120
      %v571 = vpop.permute.xlu0 %570
      %v574 = vadd.f32 %v547, %v569
      %v575 = vadd.f32 %v548, %v571
      %v576 = vlaneseq
      %v577 = vshrl.u32 %v576, 7
      %v578 = vsub.s32 5, %v577
      %v579 = vrot.slane %v283, %v578
      %581 = vrot.lane.b32.xlu0 %v579, 12
      %v582 = vpop.permute.xlu0 %581
      %v584 = vmul.f32 %v279, %v582
      %v585 = vmul.f32 %v280, %v582
      %v586 = vmul.f32 %v281, %v582
      %v590 = vrot.slane %v584, 2
      %v591 = vrot.slane %v585, 2
      %v592 = vsel %vm512, %v590, %v591
      %v593 = vrot.slane %v586, 2
      %v594 = vsel %vm512, %v591, %v593
      %595 = vrot.lane.b32.xlu0 %v592, 116
      %v596 = vpop.permute.xlu0 %595
      %597 = vrot.lane.b32.xlu0 %v594, 116
      %v598 = vpop.permute.xlu0 %597
      %v601 = vadd.f32 %v574, %v596
      %v602 = vadd.f32 %v575, %v598
      %v603 = vlaneseq
      %v604 = vshrl.u32 %v603, 7
      %v605 = vsub.s32 6, %v604
      %v606 = vrot.slane %v283, %v605
      %608 = vrot.lane.b32.xlu0 %v606, 16
      %v609 = vpop.permute.xlu0 %608
      %v611 = vmul.f32 %v279, %v609
      %v612 = vmul.f32 %v280, %v609
      %v613 = vmul.f32 %v281, %v609
      %v617 = vrot.slane %v611, 2
      %v618 = vrot.slane %v612, 2
      %v619 = vsel %vm512, %v617, %v618
      %v620 = vrot.slane %v613, 2
      %v621 = vsel %vm512, %v618, %v620
      %622 = vrot.lane.b32.xlu0 %v619, 112
      %v623 = vpop.permute.xlu0 %622
      %624 = vrot.lane.b32.xlu0 %v621, 112
      %v625 = vpop.permute.xlu0 %624
      %v628 = vadd.f32 %v601, %v623
      %v629 = vadd.f32 %v602, %v625
      %v630 = vlaneseq
      %v631 = vshrl.u32 %v630, 7
      %v632 = vsub.s32 7, %v631
      %v633 = vrot.slane %v283, %v632
      %v634 = vmul.f32 %v279, %v633
      %v635 = vmul.f32 %v280, %v633
      %v636 = vmul.f32 %v281, %v633
      %vm640 = vcmask 1044480
      %v641 = vrot.slane %v634, 3
      %v642 = vrot.slane %v635, 3
      %v643 = vsel %vm640, %v641, %v642
      %v644 = vrot.slane %v636, 3
      %v645 = vsel %vm640, %v642, %v644
      %v648 = vadd.f32 %v628, %v643
      %v649 = vadd.f32 %v629, %v645
      %v650 = vlaneseq
      %v651 = vshrl.u32 %v650, 7
      %v652 = vsub.s32 0, %v651
      %v653 = vrot.slane %v284, %v652
      %655 = vrot.lane.b32.xlu0 %v653, 4
      %v656 = vpop.permute.xlu0 %655
      %v658 = vmul.f32 %v279, %v656
      %v659 = vmul.f32 %v280, %v656
      %v660 = vmul.f32 %v281, %v656
      %v664 = vrot.slane %v658, 3
      %v665 = vrot.slane %v659, 3
      %v666 = vsel %vm640, %v664, %v665
      %v667 = vrot.slane %v660, 3
      %v668 = vsel %vm640, %v665, %v667
      %669 = vrot.lane.b32.xlu0 %v666, 124
      %v670 = vpop.permute.xlu0 %669
      %671 = vrot.lane.b32.xlu0 %v668, 124
      %v672 = vpop.permute.xlu0 %671
      %v675 = vadd.f32 %v648, %v670
      %v676 = vadd.f32 %v649, %v672
      %v677 = vlaneseq
      %v678 = vshrl.u32 %v677, 7
      %v679 = vsub.s32 1, %v678
      %v680 = vrot.slane %v284, %v679
      %682 = vrot.lane.b32.xlu0 %v680, 8
      %v683 = vpop.permute.xlu0 %682
      %v685 = vmul.f32 %v279, %v683
      %v686 = vmul.f32 %v280, %v683
      %v687 = vmul.f32 %v281, %v683
      %v691 = vrot.slane %v685, 3
      %v692 = vrot.slane %v686, 3
      %v693 = vsel %vm640, %v691, %v692
      %v694 = vrot.slane %v687, 3
      %v695 = vsel %vm640, %v692, %v694
      %696 = vrot.lane.b32.xlu0 %v693, 120
      %v697 = vpop.permute.xlu0 %696
      %698 = vrot.lane.b32.xlu0 %v695, 120
      %v699 = vpop.permute.xlu0 %698
      %v702 = vadd.f32 %v675, %v697
      %v703 = vadd.f32 %v676, %v699
      %v704 = vlaneseq
      %v705 = vshrl.u32 %v704, 7
      %v706 = vsub.s32 2, %v705
      %v707 = vrot.slane %v284, %v706
      %709 = vrot.lane.b32.xlu0 %v707, 12
      %v710 = vpop.permute.xlu0 %709
      %v712 = vmul.f32 %v279, %v710
      %v713 = vmul.f32 %v280, %v710
      %v714 = vmul.f32 %v281, %v710
      %v718 = vrot.slane %v712, 3
      %v719 = vrot.slane %v713, 3
      %v720 = vsel %vm640, %v718, %v719
      %v721 = vrot.slane %v714, 3
      %v722 = vsel %vm640, %v719, %v721
      %723 = vrot.lane.b32.xlu0 %v720, 116
      %v724 = vpop.permute.xlu0 %723
      %725 = vrot.lane.b32.xlu0 %v722, 116
      %v726 = vpop.permute.xlu0 %725
      %v729 = vadd.f32 %v702, %v724
      %v730 = vadd.f32 %v703, %v726
      %v731 = vlaneseq
      %v732 = vshrl.u32 %v731, 7
      %v733 = vsub.s32 3, %v732
      %v734 = vrot.slane %v284, %v733
      %736 = vrot.lane.b32.xlu0 %v734, 16
      %v737 = vpop.permute.xlu0 %736
      %v739 = vmul.f32 %v279, %v737
      %v740 = vmul.f32 %v280, %v737
      %v741 = vmul.f32 %v281, %v737
      %v745 = vrot.slane %v739, 3
      %v746 = vrot.slane %v740, 3
      %v747 = vsel %vm640, %v745, %v746
      %v748 = vrot.slane %v741, 3
      %v749 = vsel %vm640, %v746, %v748
      %750 = vrot.lane.b32.xlu0 %v747, 112
      %v751 = vpop.permute.xlu0 %750
      %752 = vrot.lane.b32.xlu0 %v749, 112
      %v753 = vpop.permute.xlu0 %752
      %v756 = vadd.f32 %v729, %v751
      %v757 = vadd.f32 %v730, %v753
      %v758 = vlaneseq
      %v759 = vshrl.u32 %v758, 7
      %v760 = vsub.s32 4, %v759
      %v761 = vrot.slane %v284, %v760
      %v762 = vmul.f32 %v279, %v761
      %v763 = vmul.f32 %v280, %v761
      %v764 = vmul.f32 %v281, %v761
      %vm768 = vcmask 1043456
      %v769 = vrot.slane %v762, 4
      %v770 = vrot.slane %v763, 4
      %v771 = vsel %vm768, %v769, %v770
      %v772 = vrot.slane %v764, 4
      %v773 = vsel %vm768, %v770, %v772
      %v776 = vadd.f32 %v756, %v771
      %v777 = vadd.f32 %v757, %v773
      %v778 = vlaneseq
      %v779 = vshrl.u32 %v778, 7
      %v780 = vsub.s32 5, %v779
      %v781 = vrot.slane %v284, %v780
      %783 = vrot.lane.b32.xlu0 %v781, 4
      %v784 = vpop.permute.xlu0 %783
      %v786 = vmul.f32 %v279, %v784
      %v787 = vmul.f32 %v280, %v784
      %v788 = vmul.f32 %v281, %v784
      %v792 = vrot.slane %v786, 4
      %v793 = vrot.slane %v787, 4
      %v794 = vsel %vm768, %v792, %v793
      %v795 = vrot.slane %v788, 4
      %v796 = vsel %vm768, %v793, %v795
      %797 = vrot.lane.b32.xlu0 %v794, 124
      %v798 = vpop.permute.xlu0 %797
      %799 = vrot.lane.b32.xlu0 %v796, 124
      %v800 = vpop.permute.xlu0 %799
      %v803 = vadd.f32 %v776, %v798
      %v804 = vadd.f32 %v777, %v800
      %v805 = vlaneseq
      %v806 = vshrl.u32 %v805, 7
      %v807 = vsub.s32 6, %v806
      %v808 = vrot.slane %v284, %v807
      %810 = vrot.lane.b32.xlu0 %v808, 8
      %v811 = vpop.permute.xlu0 %810
      %v813 = vmul.f32 %v279, %v811
      %v814 = vmul.f32 %v280, %v811
      %v815 = vmul.f32 %v281, %v811
      %v819 = vrot.slane %v813, 4
      %v820 = vrot.slane %v814, 4
      %v821 = vsel %vm768, %v819, %v820
      %v822 = vrot.slane %v815, 4
      %v823 = vsel %vm768, %v820, %v822
      %824 = vrot.lane.b32.xlu0 %v821, 120
      %v825 = vpop.permute.xlu0 %824
      %826 = vrot.lane.b32.xlu0 %v823, 120
      %v827 = vpop.permute.xlu0 %826
      %v830 = vadd.f32 %v803, %v825
      %v831 = vadd.f32 %v804, %v827
      %v832 = vlaneseq
      %v833 = vshrl.u32 %v832, 7
      %v834 = vsub.s32 7, %v833
      %v835 = vrot.slane %v284, %v834
      %837 = vrot.lane.b32.xlu0 %v835, 12
      %v838 = vpop.permute.xlu0 %837
      %v840 = vmul.f32 %v279, %v838
      %v841 = vmul.f32 %v280, %v838
      %v842 = vmul.f32 %v281, %v838
      %v846 = vrot.slane %v840, 4
      %v847 = vrot.slane %v841, 4
      %v848 = vsel %vm768, %v846, %v847
      %v849 = vrot.slane %v842, 4
      %v850 = vsel %vm768, %v847, %v849
      %851 = vrot.lane.b32.xlu0 %v848, 116
      %v852 = vpop.permute.xlu0 %851
      %853 = vrot.lane.b32.xlu0 %v850, 116
      %v854 = vpop.permute.xlu0 %853
      %v857 = vadd.f32 %v830, %v852
      %v858 = vadd.f32 %v831, %v854
      %v859 = vlaneseq
      %v860 = vshrl.u32 %v859, 7
      %v861 = vsub.s32 0, %v860
      %v862 = vrot.slane %v285, %v861
      %864 = vrot.lane.b32.xlu0 %v862, 16
      %v865 = vpop.permute.xlu0 %864
      %v867 = vmul.f32 %v279, %v865
      %v868 = vmul.f32 %v280, %v865
      %v869 = vmul.f32 %v281, %v865
      %v873 = vrot.slane %v867, 4
      %v874 = vrot.slane %v868, 4
      %v875 = vsel %vm768, %v873, %v874
      %v876 = vrot.slane %v869, 4
      %v877 = vsel %vm768, %v874, %v876
      %878 = vrot.lane.b32.xlu0 %v875, 112
      %v879 = vpop.permute.xlu0 %878
      %880 = vrot.lane.b32.xlu0 %v877, 112
      %v881 = vpop.permute.xlu0 %880
      %v884 = vadd.f32 %v857, %v879
      %v885 = vadd.f32 %v858, %v881
      %v886 = vld [vmem:[%s2] sm:$0x1]
      %v888 = vlaneseq
      %v889 = vshrl.u32 %v888, 7
      %v890 = vsub.s32 0, %v889
      %v891 = vrot.slane %v886, %v890
      %v893 = vmul.f32 %v884, %v891
      %v894 = vmul.f32 %v885, %v891
      %v895 = vld [vmem:[%s3] sm:$0x1]
      %v897 = vlaneseq
      %v898 = vshrl.u32 %v897, 7
      %v899 = vsub.s32 0, %v898
      %v900 = vrot.slane %v895, %v899
      %v902 = vadd.f32 %v893, %v900
      %v903 = vadd.f32 %v894, %v900
      %vm904 = vcmp.ge.f32.partialorder %v902, 0.0
      %vm905 = vcmp.ge.f32.partialorder %v903, 0.0
      %v906 = vmul.f32 %v902, 0.1
      %v907 = vmul.f32 %v903, 0.1
      %v908 = vsel %vm904, %v902, %v906
      %v909 = vsel %vm905, %v903, %v907
      %v910 = vld [vmem:[%s4] sm:$0xff]
      %v911 = vld [vmem:[%s4 + $0x8] sm:$0xff]
      %v912 = vld [vmem:[%s4 + $0x10] sm:$0xff]
      %v913 = vld [vmem:[%s4 + $0x18] sm:$0xff]
      %v914 = vld [vmem:[%s4 + $0x20] sm:$0xff]
      %v915 = vld [vmem:[%s4 + $0x28] sm:$0xff]
      %v916 = vld [vmem:[%s4 + $0x30] sm:$0xff]
      %v917 = vld [vmem:[%s4 + $0x38] sm:$0xff]
      %vm918 = vcmask 523264
      %v920 = vsel %vm918, %v908, 0
      %v923 = vsel %vm918, %v909, 0
      %925 = vmatprep.subr.mxu0 0.0
      %926 = vmatpush1.msra.mxu0 %v910
      %927 = vmatprep.subr.mxu0 0.0
      %928 = vmatpush1.msra.mxu0 %v911
      %929 = vmatprep.subr.mxu0 0.0
      %930 = vmatpush1.msra.mxu0 %v912
      %931 = vmatprep.subr.mxu0 0.0
      %932 = vmatpush1.msra.mxu0 %v913
      %933 = vmatprep.subr.mxu0 0.0
      %934 = vmatpush1.msra.mxu0 %v914
      %935 = vmatprep.subr.mxu0 0.0
      %936 = vmatpush1.msra.mxu0 %v915
      %937 = vmatprep.subr.mxu0 0.0
      %938 = vmatpush1.msra.mxu0 %v916
      %939 = vmatprep.subr.mxu0 0.0
      %940 = vmatpush1.msra.mxu0 %v917
      %941 = vmatprep.subr.mxu0 0.0
      %942 = vmatpush1.msra.mxu0 0.0
      %943 = vmatprep.subr.mxu0 0.0
      %944 = vmatpush1.msra.mxu0 0.0
      %945 = vmatprep.subr.mxu0 0.0
      %946 = vmatpush1.msra.mxu0 0.0
      %947 = vmatprep.subr.mxu0 0.0
      %948 = vmatpush1.msra.mxu0 0.0
      %949 = vmatprep.subr.mxu0 0.0
      %950 = vmatpush1.msra.mxu0 0.0
      %951 = vmatprep.subr.mxu0 0.0
      %952 = vmatpush1.msra.mxu0 0.0
      %953 = vmatprep.subr.mxu0 0.0
      %954 = vmatpush1.msra.mxu0 0.0
      %955 = vmatprep.subr.mxu0 0.0
      %956 = vmatpush1.msra.mxu0 0.0
      %957 = vmatprep.subr.mxu0 0.0
      %958 = vmatpush1.msra.mxu0 0.0
      %959 = vmatprep.subr.mxu0 0.0
      %960 = vmatpush1.msra.mxu0 0.0
      %961 = vmatprep.subr.mxu0 0.0
      %962 = vmatpush1.msra.mxu0 0.0
      %963 = vmatprep.subr.mxu0 0.0
      %964 = vmatpush1.msra.mxu0 0.0
      %965 = vmatprep.subr.mxu0 0.0
      %966 = vmatpush1.msra.mxu0 0.0
      %967 = vmatprep.subr.mxu0 0.0
      %968 = vmatpush1.msra.mxu0 0.0
      %969 = vmatprep.subr.mxu0 0.0
      %970 = vmatpush1.msra.mxu0 0.0
      %971 = vmatprep.subr.mxu0 0.0
      %972 = vmatpush1.msra.mxu0 0.0
      %973 = vmatprep.subr.mxu0 0.0
      %974 = vmatpush1.msra.mxu0 0.0
      %975 = vmatprep.subr.mxu0 0.0
      %976 = vmatpush1.msra.mxu0 0.0
      %977 = vmatprep.subr.mxu0 0.0
      %978 = vmatpush1.msra.mxu0 0.0
      %979 = vmatprep.subr.mxu0 0.0
      %980 = vmatpush1.msra.mxu0 0.0
      %981 = vmatprep.subr.mxu0 0.0
      %982 = vmatpush1.msra.mxu0 0.0
      %983 = vmatprep.subr.mxu0 0.0
      %984 = vmatpush1.msra.mxu0 0.0
      %985 = vmatprep.subr.mxu0 0.0
      %986 = vmatpush1.msra.mxu0 0.0
      %987 = vmatprep.subr.mxu0 0.0
      %988 = vmatpush1.msra.mxu0 0.0
      %989 = vmatprep.mubr.f32.mxu0 0.0
      %990 = vmatmul.mubr.f32.gmra.mrb[0].mxu0 %v920
      %v991 = vpop.f32.mrb[0].mxu0
      %v992 = vadd.f32 0.0, %v991
      %v993 = vpop.f32.mrb[0].mxu0
      %994 = vmatprep.mubr.f32.mxu0 0.0
      %995 = vmatmul.mubr.f32.gmra.mrb[0].mxu0 %v923
      %v996 = vpop.f32.mrb[0].mxu0
      %v997 = vadd.f32 0.0, %v996
      %v998 = vpop.f32.mrb[0].mxu0
      %999 = vdwg.mxu0
      %v1000 = vld [vmem:[%s5] sm:$0x1]
      %v1002 = vlaneseq
      %v1003 = vshrl.u32 %v1002, 7
      %v1004 = vsub.s32 0, %v1003
      %v1005 = vrot.slane %v1000, %v1004
      %v1007 = vmul.f32 %v992, %v1005
      %v1008 = vmul.f32 %v997, %v1005
      %v1009 = vld [vmem:[%s6] sm:$0x1]
      %v1011 = vlaneseq
      %v1012 = vshrl.u32 %v1011, 7
      %v1013 = vsub.s32 0, %v1012
      %v1014 = vrot.slane %v1009, %v1013
      %v1016 = vadd.f32 %v1007, %v1014
      %v1017 = vadd.f32 %v1008, %v1014
      %v1018 = vlaneseq
      %v1019 = vshrl.u32 %v1018, 7
      %v1020 = vadd.s32 %v1019, 8
      %v1021 = vlaneseq
      %v1022 = vand.u32 %v1021, 127
      %vm1023 = vcmp.eq.s32.totalorder %v1019, 0
      %vm1024 = vcmp.eq.s32.totalorder %v1020, 0
      %vm1025 = vcmp.eq.s32.totalorder %v1019, 15
      %vm1026 = vcmp.eq.s32.totalorder %v1020, 15
      %vm1027 = vmor %vm1023, %vm1025
      %vm1028 = vmor %vm1024, %vm1026
      %vm1029 = vcmp.lt.s32.totalorder %v1022, 8
      %vm1030 = vmor %vm1027, %vm1029
      %vm1031 = vmor %vm1028, %vm1029
      %vm1032 = vcmp.ge.s32.totalorder %v1022, 120
      %vm1033 = vmor %vm1030, %vm1032
      %vm1034 = vmor %vm1031, %vm1032
      %v1035 = vsel %vm1033, %v1014, %v1016
      %v1036 = vsel %vm1034, %v1014, %v1017
      %1037 = vst [vmem:[%s278] sm:$0xff] %v1035
      %1038 = vst [vmem:[%s278 + $0x8] sm:$0xff] %v1036
      %p1039 = scmp.lt.s32.totalorder %s18, 1
      %s1040 = scalar_select %p1039, %s18, 1
      %s1041 = smul.addr %s1040, 2
      %s1042 = smul.addr %s1041, 8
      %s1043 = scalar_lea.vmem %s7, %s1042
      // Predicated region
      $region49: #{deepwish_forward.1} parent=47 // pred_check
        %p1044 = pneg %p188
      $region50: #{deepwish_forward.1} parent=47 // pred_check_branch
        %1046 = sbr.rel (%p1044) target = $region52
      $region51: #{deepwish_forward.1} parent=47 // pred_region
        _
      $region52: #{deepwish_forward.1} parent=47 // pred_fallthru
        _
    $region48: #{deepwish_forward.1} parent=5 // pred_fallthru
      _
    %p1047 = scmp.le.s32.totalorder 2, %s13
    // Predicated region
    $region53: #{deepwish_forward.1} parent=5 // pred_check
      %p1048 = pneg %p1047
    $region54: #{deepwish_forward.1} parent=5 // pred_check_branch
      %1050 = sbr.rel (%p1048) target = $region56
    $region55: #{deepwish_forward.1} parent=5 // pred_region
      %s1051 = ssub.s32 %s13, 2
      // Predicated region
      $region57: #{deepwish_forward.1} parent=55 // pred_check
        %p1052 = pneg %p194
      $region58: #{deepwish_forward.1} parent=55 // pred_check_branch
        %1054 = sbr.rel (%p1052) target = $region60
      $region59: #{deepwish_forward.1} parent=55 // pred_region
        %p1055 = scmp.lt.s32.totalorder %s19, 1
        %s1056 = scalar_select %p1055, %s19, 1
        %s1057 = smul.addr %s1056, 2
        %s1058 = smul.addr %s1057, 8
        %s1059 = scalar_lea.vmem %s7, %s1058
      $region60: #{deepwish_forward.1} parent=55 // pred_fallthru
        _
    $region56: #{deepwish_forward.1} parent=5 // pred_fallthru
      _
  $region6: #{deepwish_forward.1} parent=0 // loop_footer
    %s17 = sadd.s32 1, %s13
  $region7: #{deepwish_forward.1} parent=0 // loop_footer_branch
    %12 = sbr.rel target = $region3
  $region8: #{deepwish_forward.1} parent=0 // loop_exit
    _

</llo_original>
